<compile_context>
chip_gen: v6e
topology: v6e:2x2x1
jax: 0.10.0
libtpu: 0.0.40
codegen_flags: <defaults>
</compile_context>

<pallas_src>
import jax
import jax.numpy as jnp
from jax import lax
from jax.experimental import pallas as pl
from jax.experimental.pallas import tpu as pltpu


def _sigmoid(x):
    # Stable logistic via tanh (EUP slot), avoids exp overflow and VPU divide.
    return 0.5 * (jnp.tanh(0.5 * x) + 1.0)


def gru_kernel(x_ref,        # (T*Bp, I)   time-major, batch-padded input rows
               wi_ref,       # (I, 3Hp)    packed [W_ir | W_iz | W_in] (transposed)
               wh_ref,       # (Hp, 3Hp)   packed [W_hr | W_hz | W_hn] (transposed)
               bcat_ref,     # (1, 3Hp)    [b_ir+b_hr | b_iz+b_hz | b_in]
               bhn_ref,      # (1, Hp)     b_hn (must stay inside r * (...))
               wfc_ref,      # (Hp, Op)    fc weight (transposed, output lane-padded)
               bfc_ref,      # (1, Op)     fc bias (output lane-padded)
               out_ref,      # (Bp, Op)
               gi_ref):      # scratch (T*Bp, 3Hp): hoisted input projections
    TB = x_ref.shape[0]
    Hp = wh_ref.shape[0]
    Bp = out_ref.shape[0]
    T = TB // Bp

    # --- hoisted out of the time loop: one MXU matmul for ALL timesteps plus
    # the folded bias add (broadcast happens exactly once). ---
    gi_ref[...] = (jnp.dot(x_ref[...], wi_ref[...],
                           preferred_element_type=jnp.float32)
                   + bcat_ref[...])

    # Hoisted broadcast of b_hn to (Bp, Hp) (JAX does not CSE broadcasts).
    bhn_b = jnp.broadcast_to(bhn_ref[...], (Bp, Hp))

    def step(t, h):
        row = pl.multiple_of(t * Bp, 8)                 # sublane-aligned slice
        g_i = gi_ref[pl.ds(row, Bp), :]                 # (Bp, 3Hp)
        # Single MXU matmul per timestep (all 3 hidden-gate products fused).
        g_h = jnp.dot(h, wh_ref[...], preferred_element_type=jnp.float32)

        rz = _sigmoid(g_i[:, :2 * Hp] + g_h[:, :2 * Hp])   # r and z together
        r = rz[:, :Hp]
        z = rz[:, Hp:]
        n = jnp.tanh(g_i[:, 2 * Hp:] + r * (g_h[:, 2 * Hp:] + bhn_b))
        return (1.0 - z) * n + z * h

    h0 = jnp.zeros((Bp, Hp), jnp.float32)               # h0 = 0 (matches torch.zeros)
    h_T = lax.fori_loop(0, T, step, h0, unroll=True)

    logits = jnp.dot(h_T, wfc_ref[...],
                     preferred_element_type=jnp.float32) + bfc_ref[...]
    out_ref[...] = _sigmoid(logits)                      # lane-dense (Bp, Op) store


def gru_net_forward(x, params):
    """x: (B, T, I) float32, batch-first like the PyTorch module."""
    B, T, I = x.shape
    H = params["whr"].shape[0]
    O = params["wfc"].shape[1]

    Hp = ((H + 127) // 128) * 128     # lane-pad hidden dim   (50 -> 128)
    Bp = ((B + 7) // 8) * 8           # sublane-pad batch     (4  -> 8)
    Op = ((O + 127) // 128) * 128     # lane-pad fc output    (1  -> 128)

    # --- one-time weight packing / zero padding (outside the kernel) ---
    def pad_hidden_cols(w, rows_p):
        out = jnp.zeros((rows_p, Hp), jnp.float32)
        return out.at[: w.shape[0], :H].set(w)

    wi_cat = jnp.concatenate(
        [pad_hidden_cols(params["wir"], I),
         pad_hidden_cols(params["wiz"], I),
         pad_hidden_cols(params["win"], I)], axis=1)          # (I, 3Hp)
    wh_cat = jnp.concatenate(
        [pad_hidden_cols(params["whr"], Hp),
         pad_hidden_cols(params["whz"], Hp),
         pad_hidden_cols(params["whn"], Hp)], axis=1)         # (Hp, 3Hp)

    def pad_row(b):
        out = jnp.zeros((1, Hp), jnp.float32)
        return out.at[:, :H].set(b)

    bcat = jnp.concatenate(
        [pad_row(params["bir"] + params["bhr"]),
         pad_row(params["biz"] + params["bhz"]),
         pad_row(params["bin"])], axis=1)                     # (1, 3Hp)
    bhn = pad_row(params["bhn"])                              # (1, Hp)

    wfc_p = jnp.zeros((Hp, Op), jnp.float32).at[:H, :O].set(params["wfc"])
    bfc_p = jnp.zeros((1, Op), jnp.float32).at[:, :O].set(params["bfc"])

    # Batch-first -> time-major, pad batch to Bp, flatten to (T*Bp, I) rows.
    x_tm = jnp.transpose(x, (1, 0, 2))                        # (T, B, I)
    x_p = jnp.zeros((T, Bp, I), jnp.float32).at[:, :B, :].set(x_tm)
    x2d = x_p.reshape(T * Bp, I)

    vmem = pl.BlockSpec(memory_space=pltpu.MemorySpace.VMEM)

    out_p = pl.pallas_call(
        gru_kernel,
        out_shape=jax.ShapeDtypeStruct((Bp, Op), jnp.float32),
        in_specs=[vmem] * 7,
        out_specs=pl.BlockSpec(memory_space=pltpu.MemorySpace.VMEM),
        scratch_shapes=[pltpu.VMEM((T * Bp, 3 * Hp), jnp.float32)],
    )(x2d, wi_cat, wh_cat, bcat, bhn, wfc_p, bfc_p)

    return out_p[:B, :O]


def gru_net_reference(x, params):
    """Pure-JAX reference (lax.scan) for correctness checking."""
    B = x.shape[0]
    H = params["whr"].shape[0]
    xs = jnp.transpose(x, (1, 0, 2))  # (T, B, I)

    def step(h, x_t):
        r = jax.nn.sigmoid(x_t @ params["wir"] + params["bir"]
                           + h @ params["whr"] + params["bhr"])
        z = jax.nn.sigmoid(x_t @ params["wiz"] + params["biz"]
                           + h @ params["whz"] + params["bhz"])
        n = jnp.tanh(x_t @ params["win"] + params["bin"]
                     + r * (h @ params["whn"] + params["bhn"]))
        h_new = (1.0 - z) * n + z * h
        return h_new, None

    h0 = jnp.zeros((B, H), jnp.float32)
    h_last, _ = lax.scan(step, h0, xs)
    return jax.nn.sigmoid(h_last @ params["wfc"] + params["bfc"])


def init_params(key, input_size, hidden_size, output_size):
    """Deterministic init mimicking PyTorch's U(-1/sqrt(H), 1/sqrt(H))."""
    H, I, O = hidden_size, input_size, output_size
    bound = 1.0 / jnp.sqrt(jnp.float32(H))
    keys = jax.random.split(key, 14)
    u = lambda k, shape: jax.random.uniform(k, shape, jnp.float32, -bound, bound)
    return {
        # input->hidden weights, stored transposed: (I, H)
        "wir": u(keys[0], (I, H)), "wiz": u(keys[1], (I, H)), "win": u(keys[2], (I, H)),
        # hidden->hidden weights, stored transposed: (H, H)
        "whr": u(keys[3], (H, H)), "whz": u(keys[4], (H, H)), "whn": u(keys[5], (H, H)),
        # biases as (1, H) rows
        "bir": u(keys[6], (1, H)), "biz": u(keys[7], (1, H)), "bin": u(keys[8], (1, H)),
        "bhr": u(keys[9], (1, H)), "bhz": u(keys[10], (1, H)), "bhn": u(keys[11], (1, H)),
        # fc: weight transposed (H, O), bias (1, O)
        "wfc": u(keys[12], (H, O)), "bfc": u(keys[13], (1, O)),
    }


if __name__ == "__main__":
    # Small shapes consistent with GRUNet defaults:
    # input_size=1, hidden_size=50, num_layers=1, output_size=1
    # (dropout is inactive in the PyTorch module since num_layers == 1)
    B, T, I, H, O = 4, 8, 1, 50, 1

    key = jax.random.PRNGKey(0)
    k_x, k_p = jax.random.split(key)
    x = jax.random.normal(k_x, (B, T, I), jnp.float32)
    params = init_params(k_p, I, H, O)

    out = gru_net_forward(x, params)
    out = jax.block_until_ready(out)

    ref = jax.block_until_ready(gru_net_reference(x, params))
    assert out.shape == (B, O)
    assert jnp.allclose(out, ref, atol=1e-5, rtol=1e-5), (out, ref)

    print("KERNEL_OK")
</pallas_src>

<mosaic_0001>
module attributes {stable_mosaic.version = 11 : i64} {
  func.func @gru_kernel(%arg0: memref<64x1xf32, #tpu.memory_space<vmem>>, %arg1: memref<1x384xf32, #tpu.memory_space<vmem>>, %arg2: memref<128x384xf32, #tpu.memory_space<vmem>>, %arg3: memref<1x384xf32, #tpu.memory_space<vmem>>, %arg4: memref<1x128xf32, #tpu.memory_space<vmem>>, %arg5: memref<128x128xf32, #tpu.memory_space<vmem>>, %arg6: memref<1x128xf32, #tpu.memory_space<vmem>>, %arg7: memref<8x128xf32, #tpu.memory_space<vmem>>, %arg8: memref<64x384xf32, #tpu.memory_space<vmem>>) attributes {dimension_semantics = [], scalar_prefetch = 0 : i64, scratch_operands = 1 : i64, tpu.core_type = #tpu.core_type<tc>} {
    %c0 = arith.constant 0 : index
    %c0_0 = arith.constant 0 : index
    %0 = vector.load %arg0[%c0, %c0_0] : memref<64x1xf32, #tpu.memory_space<vmem>>, vector<64x1xf32>
    %c0_1 = arith.constant 0 : index
    %c0_2 = arith.constant 0 : index
    %1 = vector.load %arg1[%c0_1, %c0_2] : memref<1x384xf32, #tpu.memory_space<vmem>>, vector<1x384xf32>
    %cst = arith.constant dense<0.000000e+00> : vector<64x384xf32>
    %2 = tpu.matmul %0, %1, %cst {dimension_numbers = #tpu.dot_dimension_numbers<[1], [0], [0], [1], [0, 0, 1, 1], [], []>} : vector<64x1xf32>, vector<1x384xf32>, vector<64x384xf32> -> vector<64x384xf32>
    %c0_3 = arith.constant 0 : index
    %c0_4 = arith.constant 0 : index
    %3 = vector.load %arg3[%c0_3, %c0_4] : memref<1x384xf32, #tpu.memory_space<vmem>>, vector<1x384xf32>
    %4 = vector.broadcast %3 : vector<1x384xf32> to vector<64x384xf32>
    %5 = arith.addf %2, %4 : vector<64x384xf32>
    %c0_5 = arith.constant 0 : index
    %c0_6 = arith.constant 0 : index
    %6 = vector.load %arg8[%c0_5, %c0_6] : memref<64x384xf32, #tpu.memory_space<vmem>>, vector<64x384xf32>
    tpu.vector_store %arg8[%c0_5, %c0_6], %5 {strides = array<i32>} : memref<64x384xf32, #tpu.memory_space<vmem>>, vector<64x384xf32>,
    %c0_7 = arith.constant 0 : index
    %c0_8 = arith.constant 0 : index
    %7 = vector.load %arg4[%c0_7, %c0_8] : memref<1x128xf32, #tpu.memory_space<vmem>>, vector<1x128xf32>
    %8 = vector.shape_cast %7 : vector<1x128xf32> to vector<1x128xf32>
    %9 = vector.broadcast %8 : vector<1x128xf32> to vector<8x128xf32>
    %cst_9 = arith.constant 0.000000e+00 : f32
    %10 = vector.broadcast %cst_9 : f32 to vector<8x128xf32>
    %c0_i32 = arith.constant 0 : i32
    %c8_i32 = arith.constant 8 : i32
    %11 = arith.muli %c0_i32, %c8_i32 : i32
    %12 = tpu.assume_multiple %11, 8 : i32
    %13 = arith.index_cast %12 : i32 to index
    %c0_10 = arith.constant 0 : index
    %14 = vector.load %arg8[%13, %c0_10] : memref<64x384xf32, #tpu.memory_space<vmem>>, vector<8x384xf32>
    %c0_11 = arith.constant 0 : index
    %c0_12 = arith.constant 0 : index
    %15 = vector.load %arg2[%c0_11, %c0_12] : memref<128x384xf32, #tpu.memory_space<vmem>>, vector<128x384xf32>
    %cst_13 = arith.constant dense<0.000000e+00> : vector<8x384xf32>
    %16 = tpu.matmul %10, %15, %cst_13 {dimension_numbers = #tpu.dot_dimension_numbers<[1], [0], [0], [1], [0, 0, 1, 1], [], []>} : vector<8x128xf32>, vector<128x384xf32>, vector<8x384xf32> -> vector<8x384xf32>
    %17 = vector.extract_strided_slice %14 {offsets = [0, 0], sizes = [8, 256], strides = [1, 1]} : vector<8x384xf32> to vector<8x256xf32>
    %18 = vector.extract_strided_slice %16 {offsets = [0, 0], sizes = [8, 256], strides = [1, 1]} : vector<8x384xf32> to vector<8x256xf32>
    %19 = arith.addf %17, %18 : vector<8x256xf32>
    %cst_14 = arith.constant 5.000000e-01 : f32
    %20 = vector.broadcast %cst_14 : f32 to vector<8x256xf32>
    %21 = arith.mulf %20, %19 : vector<8x256xf32>
    %22 = math.tanh %21 : vector<8x256xf32>
    %cst_15 = arith.constant 1.000000e+00 : f32
    %23 = vector.broadcast %cst_15 : f32 to vector<8x256xf32>
    %24 = arith.addf %22, %23 : vector<8x256xf32>
    %cst_16 = arith.constant 5.000000e-01 : f32
    %25 = vector.broadcast %cst_16 : f32 to vector<8x256xf32>
    %26 = arith.mulf %25, %24 : vector<8x256xf32>
    %27 = vector.extract_strided_slice %26 {offsets = [0, 0], sizes = [8, 128], strides = [1, 1]} : vector<8x256xf32> to vector<8x128xf32>
    %28 = vector.extract_strided_slice %26 {offsets = [0, 128], sizes = [8, 128], strides = [1, 1]} : vector<8x256xf32> to vector<8x128xf32>
    %29 = vector.extract_strided_slice %14 {offsets = [0, 256], sizes = [8, 128], strides = [1, 1]} : vector<8x384xf32> to vector<8x128xf32>
    %30 = vector.extract_strided_slice %16 {offsets = [0, 256], sizes = [8, 128], strides = [1, 1]} : vector<8x384xf32> to vector<8x128xf32>
    %31 = arith.addf %30, %9 : vector<8x128xf32>
    %32 = arith.mulf %27, %31 : vector<8x128xf32>
    %33 = arith.addf %29, %32 : vector<8x128xf32>
    %34 = math.tanh %33 : vector<8x128xf32>
    %cst_17 = arith.constant 1.000000e+00 : f32
    %35 = vector.broadcast %cst_17 : f32 to vector<8x128xf32>
    %36 = arith.subf %35, %28 : vector<8x128xf32>
    %37 = arith.mulf %36, %34 : vector<8x128xf32>
    %38 = arith.mulf %28, %10 : vector<8x128xf32>
    %39 = arith.addf %37, %38 : vector<8x128xf32>
    %c1_i32 = arith.constant 1 : i32
    %c8_i32_18 = arith.constant 8 : i32
    %40 = arith.muli %c1_i32, %c8_i32_18 : i32
    %41 = tpu.assume_multiple %40, 8 : i32
    %42 = arith.index_cast %41 : i32 to index
    %c0_19 = arith.constant 0 : index
    %43 = vector.load %arg8[%42, %c0_19] : memref<64x384xf32, #tpu.memory_space<vmem>>, vector<8x384xf32>
    %c0_20 = arith.constant 0 : index
    %c0_21 = arith.constant 0 : index
    %44 = vector.load %arg2[%c0_20, %c0_21] : memref<128x384xf32, #tpu.memory_space<vmem>>, vector<128x384xf32>
    %cst_22 = arith.constant dense<0.000000e+00> : vector<8x384xf32>
    %45 = tpu.matmul %39, %44, %cst_22 {dimension_numbers = #tpu.dot_dimension_numbers<[1], [0], [0], [1], [0, 0, 1, 1], [], []>} : vector<8x128xf32>, vector<128x384xf32>, vector<8x384xf32> -> vector<8x384xf32>
    %46 = vector.extract_strided_slice %43 {offsets = [0, 0], sizes = [8, 256], strides = [1, 1]} : vector<8x384xf32> to vector<8x256xf32>
    %47 = vector.extract_strided_slice %45 {offsets = [0, 0], sizes = [8, 256], strides = [1, 1]} : vector<8x384xf32> to vector<8x256xf32>
    %48 = arith.addf %46, %47 : vector<8x256xf32>
    %cst_23 = arith.constant 5.000000e-01 : f32
    %49 = vector.broadcast %cst_23 : f32 to vector<8x256xf32>
    %50 = arith.mulf %49, %48 : vector<8x256xf32>
    %51 = math.tanh %50 : vector<8x256xf32>
    %cst_24 = arith.constant 1.000000e+00 : f32
    %52 = vector.broadcast %cst_24 : f32 to vector<8x256xf32>
    %53 = arith.addf %51, %52 : vector<8x256xf32>
    %cst_25 = arith.constant 5.000000e-01 : f32
    %54 = vector.broadcast %cst_25 : f32 to vector<8x256xf32>
    %55 = arith.mulf %54, %53 : vector<8x256xf32>
    %56 = vector.extract_strided_slice %55 {offsets = [0, 0], sizes = [8, 128], strides = [1, 1]} : vector<8x256xf32> to vector<8x128xf32>
    %57 = vector.extract_strided_slice %55 {offsets = [0, 128], sizes = [8, 128], strides = [1, 1]} : vector<8x256xf32> to vector<8x128xf32>
    %58 = vector.extract_strided_slice %43 {offsets = [0, 256], sizes = [8, 128], strides = [1, 1]} : vector<8x384xf32> to vector<8x128xf32>
    %59 = vector.extract_strided_slice %45 {offsets = [0, 256], sizes = [8, 128], strides = [1, 1]} : vector<8x384xf32> to vector<8x128xf32>
    %60 = arith.addf %59, %9 : vector<8x128xf32>
    %61 = arith.mulf %56, %60 : vector<8x128xf32>
    %62 = arith.addf %58, %61 : vector<8x128xf32>
    %63 = math.tanh %62 : vector<8x128xf32>
    %cst_26 = arith.constant 1.000000e+00 : f32
    %64 = vector.broadcast %cst_26 : f32 to vector<8x128xf32>
    %65 = arith.subf %64, %57 : vector<8x128xf32>
    %66 = arith.mulf %65, %63 : vector<8x128xf32>
    %67 = arith.mulf %57, %39 : vector<8x128xf32>
    %68 = arith.addf %66, %67 : vector<8x128xf32>
    %c2_i32 = arith.constant 2 : i32
    %c8_i32_27 = arith.constant 8 : i32
    %69 = arith.muli %c2_i32, %c8_i32_27 : i32
    %70 = tpu.assume_multiple %69, 8 : i32
    %71 = arith.index_cast %70 : i32 to index
    %c0_28 = arith.constant 0 : index
    %72 = vector.load %arg8[%71, %c0_28] : memref<64x384xf32, #tpu.memory_space<vmem>>, vector<8x384xf32>
    %c0_29 = arith.constant 0 : index
    %c0_30 = arith.constant 0 : index
    %73 = vector.load %arg2[%c0_29, %c0_30] : memref<128x384xf32, #tpu.memory_space<vmem>>, vector<128x384xf32>
    %cst_31 = arith.constant dense<0.000000e+00> : vector<8x384xf32>
    %74 = tpu.matmul %68, %73, %cst_31 {dimension_numbers = #tpu.dot_dimension_numbers<[1], [0], [0], [1], [0, 0, 1, 1], [], []>} : vector<8x128xf32>, vector<128x384xf32>, vector<8x384xf32> -> vector<8x384xf32>
    %75 = vector.extract_strided_slice %72 {offsets = [0, 0], sizes = [8, 256], strides = [1, 1]} : vector<8x384xf32> to vector<8x256xf32>
    %76 = vector.extract_strided_slice %74 {offsets = [0, 0], sizes = [8, 256], strides = [1, 1]} : vector<8x384xf32> to vector<8x256xf32>
    %77 = arith.addf %75, %76 : vector<8x256xf32>
    %cst_32 = arith.constant 5.000000e-01 : f32
    %78 = vector.broadcast %cst_32 : f32 to vector<8x256xf32>
    %79 = arith.mulf %78, %77 : vector<8x256xf32>
    %80 = math.tanh %79 : vector<8x256xf32>
    %cst_33 = arith.constant 1.000000e+00 : f32
    %81 = vector.broadcast %cst_33 : f32 to vector<8x256xf32>
    %82 = arith.addf %80, %81 : vector<8x256xf32>
    %cst_34 = arith.constant 5.000000e-01 : f32
    %83 = vector.broadcast %cst_34 : f32 to vector<8x256xf32>
    %84 = arith.mulf %83, %82 : vector<8x256xf32>
    %85 = vector.extract_strided_slice %84 {offsets = [0, 0], sizes = [8, 128], strides = [1, 1]} : vector<8x256xf32> to vector<8x128xf32>
    %86 = vector.extract_strided_slice %84 {offsets = [0, 128], sizes = [8, 128], strides = [1, 1]} : vector<8x256xf32> to vector<8x128xf32>
    %87 = vector.extract_strided_slice %72 {offsets = [0, 256], sizes = [8, 128], strides = [1, 1]} : vector<8x384xf32> to vector<8x128xf32>
    %88 = vector.extract_strided_slice %74 {offsets = [0, 256], sizes = [8, 128], strides = [1, 1]} : vector<8x384xf32> to vector<8x128xf32>
    %89 = arith.addf %88, %9 : vector<8x128xf32>
    %90 = arith.mulf %85, %89 : vector<8x128xf32>
    %91 = arith.addf %87, %90 : vector<8x128xf32>
    %92 = math.tanh %91 : vector<8x128xf32>
    %cst_35 = arith.constant 1.000000e+00 : f32
    %93 = vector.broadcast %cst_35 : f32 to vector<8x128xf32>
    %94 = arith.subf %93, %86 : vector<8x128xf32>
    %95 = arith.mulf %94, %92 : vector<8x128xf32>
    %96 = arith.mulf %86, %68 : vector<8x128xf32>
    %97 = arith.addf %95, %96 : vector<8x128xf32>
    %c3_i32 = arith.constant 3 : i32
    %c8_i32_36 = arith.constant 8 : i32
    %98 = arith.muli %c3_i32, %c8_i32_36 : i32
    %99 = tpu.assume_multiple %98, 8 : i32
    %100 = arith.index_cast %99 : i32 to index
    %c0_37 = arith.constant 0 : index
    %101 = vector.load %arg8[%100, %c0_37] : memref<64x384xf32, #tpu.memory_space<vmem>>, vector<8x384xf32>
    %c0_38 = arith.constant 0 : index
    %c0_39 = arith.constant 0 : index
    %102 = vector.load %arg2[%c0_38, %c0_39] : memref<128x384xf32, #tpu.memory_space<vmem>>, vector<128x384xf32>
    %cst_40 = arith.constant dense<0.000000e+00> : vector<8x384xf32>
    %103 = tpu.matmul %97, %102, %cst_40 {dimension_numbers = #tpu.dot_dimension_numbers<[1], [0], [0], [1], [0, 0, 1, 1], [], []>} : vector<8x128xf32>, vector<128x384xf32>, vector<8x384xf32> -> vector<8x384xf32>
    %104 = vector.extract_strided_slice %101 {offsets = [0, 0], sizes = [8, 256], strides = [1, 1]} : vector<8x384xf32> to vector<8x256xf32>
    %105 = vector.extract_strided_slice %103 {offsets = [0, 0], sizes = [8, 256], strides = [1, 1]} : vector<8x384xf32> to vector<8x256xf32>
    %106 = arith.addf %104, %105 : vector<8x256xf32>
    %cst_41 = arith.constant 5.000000e-01 : f32
    %107 = vector.broadcast %cst_41 : f32 to vector<8x256xf32>
    %108 = arith.mulf %107, %106 : vector<8x256xf32>
    %109 = math.tanh %108 : vector<8x256xf32>
    %cst_42 = arith.constant 1.000000e+00 : f32
    %110 = vector.broadcast %cst_42 : f32 to vector<8x256xf32>
    %111 = arith.addf %109, %110 : vector<8x256xf32>
    %cst_43 = arith.constant 5.000000e-01 : f32
    %112 = vector.broadcast %cst_43 : f32 to vector<8x256xf32>
    %113 = arith.mulf %112, %111 : vector<8x256xf32>
    %114 = vector.extract_strided_slice %113 {offsets = [0, 0], sizes = [8, 128], strides = [1, 1]} : vector<8x256xf32> to vector<8x128xf32>
    %115 = vector.extract_strided_slice %113 {offsets = [0, 128], sizes = [8, 128], strides = [1, 1]} : vector<8x256xf32> to vector<8x128xf32>
    %116 = vector.extract_strided_slice %101 {offsets = [0, 256], sizes = [8, 128], strides = [1, 1]} : vector<8x384xf32> to vector<8x128xf32>
    %117 = vector.extract_strided_slice %103 {offsets = [0, 256], sizes = [8, 128], strides = [1, 1]} : vector<8x384xf32> to vector<8x128xf32>
    %118 = arith.addf %117, %9 : vector<8x128xf32>
    %119 = arith.mulf %114, %118 : vector<8x128xf32>
    %120 = arith.addf %116, %119 : vector<8x128xf32>
    %121 = math.tanh %120 : vector<8x128xf32>
    %cst_44 = arith.constant 1.000000e+00 : f32
    %122 = vector.broadcast %cst_44 : f32 to vector<8x128xf32>
    %123 = arith.subf %122, %115 : vector<8x128xf32>
    %124 = arith.mulf %123, %121 : vector<8x128xf32>
    %125 = arith.mulf %115, %97 : vector<8x128xf32>
    %126 = arith.addf %124, %125 : vector<8x128xf32>
    %c4_i32 = arith.constant 4 : i32
    %c8_i32_45 = arith.constant 8 : i32
    %127 = arith.muli %c4_i32, %c8_i32_45 : i32
    %128 = tpu.assume_multiple %127, 8 : i32
    %129 = arith.index_cast %128 : i32 to index
    %c0_46 = arith.constant 0 : index
    %130 = vector.load %arg8[%129, %c0_46] : memref<64x384xf32, #tpu.memory_space<vmem>>, vector<8x384xf32>
    %c0_47 = arith.constant 0 : index
    %c0_48 = arith.constant 0 : index
    %131 = vector.load %arg2[%c0_47, %c0_48] : memref<128x384xf32, #tpu.memory_space<vmem>>, vector<128x384xf32>
    %cst_49 = arith.constant dense<0.000000e+00> : vector<8x384xf32>
    %132 = tpu.matmul %126, %131, %cst_49 {dimension_numbers = #tpu.dot_dimension_numbers<[1], [0], [0], [1], [0, 0, 1, 1], [], []>} : vector<8x128xf32>, vector<128x384xf32>, vector<8x384xf32> -> vector<8x384xf32>
    %133 = vector.extract_strided_slice %130 {offsets = [0, 0], sizes = [8, 256], strides = [1, 1]} : vector<8x384xf32> to vector<8x256xf32>
    %134 = vector.extract_strided_slice %132 {offsets = [0, 0], sizes = [8, 256], strides = [1, 1]} : vector<8x384xf32> to vector<8x256xf32>
    %135 = arith.addf %133, %134 : vector<8x256xf32>
    %cst_50 = arith.constant 5.000000e-01 : f32
    %136 = vector.broadcast %cst_50 : f32 to vector<8x256xf32>
    %137 = arith.mulf %136, %135 : vector<8x256xf32>
    %138 = math.tanh %137 : vector<8x256xf32>
    %cst_51 = arith.constant 1.000000e+00 : f32
    %139 = vector.broadcast %cst_51 : f32 to vector<8x256xf32>
    %140 = arith.addf %138, %139 : vector<8x256xf32>
    %cst_52 = arith.constant 5.000000e-01 : f32
    %141 = vector.broadcast %cst_52 : f32 to vector<8x256xf32>
    %142 = arith.mulf %141, %140 : vector<8x256xf32>
    %143 = vector.extract_strided_slice %142 {offsets = [0, 0], sizes = [8, 128], strides = [1, 1]} : vector<8x256xf32> to vector<8x128xf32>
    %144 = vector.extract_strided_slice %142 {offsets = [0, 128], sizes = [8, 128], strides = [1, 1]} : vector<8x256xf32> to vector<8x128xf32>
    %145 = vector.extract_strided_slice %130 {offsets = [0, 256], sizes = [8, 128], strides = [1, 1]} : vector<8x384xf32> to vector<8x128xf32>
    %146 = vector.extract_strided_slice %132 {offsets = [0, 256], sizes = [8, 128], strides = [1, 1]} : vector<8x384xf32> to vector<8x128xf32>
    %147 = arith.addf %146, %9 : vector<8x128xf32>
    %148 = arith.mulf %143, %147 : vector<8x128xf32>
    %149 = arith.addf %145, %148 : vector<8x128xf32>
    %150 = math.tanh %149 : vector<8x128xf32>
    %cst_53 = arith.constant 1.000000e+00 : f32
    %151 = vector.broadcast %cst_53 : f32 to vector<8x128xf32>
    %152 = arith.subf %151, %144 : vector<8x128xf32>
    %153 = arith.mulf %152, %150 : vector<8x128xf32>
    %154 = arith.mulf %144, %126 : vector<8x128xf32>
    %155 = arith.addf %153, %154 : vector<8x128xf32>
    %c5_i32 = arith.constant 5 : i32
    %c8_i32_54 = arith.constant 8 : i32
    %156 = arith.muli %c5_i32, %c8_i32_54 : i32
    %157 = tpu.assume_multiple %156, 8 : i32
    %158 = arith.index_cast %157 : i32 to index
    %c0_55 = arith.constant 0 : index
    %159 = vector.load %arg8[%158, %c0_55] : memref<64x384xf32, #tpu.memory_space<vmem>>, vector<8x384xf32>
    %c0_56 = arith.constant 0 : index
    %c0_57 = arith.constant 0 : index
    %160 = vector.load %arg2[%c0_56, %c0_57] : memref<128x384xf32, #tpu.memory_space<vmem>>, vector<128x384xf32>
    %cst_58 = arith.constant dense<0.000000e+00> : vector<8x384xf32>
    %161 = tpu.matmul %155, %160, %cst_58 {dimension_numbers = #tpu.dot_dimension_numbers<[1], [0], [0], [1], [0, 0, 1, 1], [], []>} : vector<8x128xf32>, vector<128x384xf32>, vector<8x384xf32> -> vector<8x384xf32>
    %162 = vector.extract_strided_slice %159 {offsets = [0, 0], sizes = [8, 256], strides = [1, 1]} : vector<8x384xf32> to vector<8x256xf32>
    %163 = vector.extract_strided_slice %161 {offsets = [0, 0], sizes = [8, 256], strides = [1, 1]} : vector<8x384xf32> to vector<8x256xf32>
    %164 = arith.addf %162, %163 : vector<8x256xf32>
    %cst_59 = arith.constant 5.000000e-01 : f32
    %165 = vector.broadcast %cst_59 : f32 to vector<8x256xf32>
    %166 = arith.mulf %165, %164 : vector<8x256xf32>
    %167 = math.tanh %166 : vector<8x256xf32>
    %cst_60 = arith.constant 1.000000e+00 : f32
    %168 = vector.broadcast %cst_60 : f32 to vector<8x256xf32>
    %169 = arith.addf %167, %168 : vector<8x256xf32>
    %cst_61 = arith.constant 5.000000e-01 : f32
    %170 = vector.broadcast %cst_61 : f32 to vector<8x256xf32>
    %171 = arith.mulf %170, %169 : vector<8x256xf32>
    %172 = vector.extract_strided_slice %171 {offsets = [0, 0], sizes = [8, 128], strides = [1, 1]} : vector<8x256xf32> to vector<8x128xf32>
    %173 = vector.extract_strided_slice %171 {offsets = [0, 128], sizes = [8, 128], strides = [1, 1]} : vector<8x256xf32> to vector<8x128xf32>
    %174 = vector.extract_strided_slice %159 {offsets = [0, 256], sizes = [8, 128], strides = [1, 1]} : vector<8x384xf32> to vector<8x128xf32>
    %175 = vector.extract_strided_slice %161 {offsets = [0, 256], sizes = [8, 128], strides = [1, 1]} : vector<8x384xf32> to vector<8x128xf32>
    %176 = arith.addf %175, %9 : vector<8x128xf32>
    %177 = arith.mulf %172, %176 : vector<8x128xf32>
    %178 = arith.addf %174, %177 : vector<8x128xf32>
    %179 = math.tanh %178 : vector<8x128xf32>
    %cst_62 = arith.constant 1.000000e+00 : f32
    %180 = vector.broadcast %cst_62 : f32 to vector<8x128xf32>
    %181 = arith.subf %180, %173 : vector<8x128xf32>
    %182 = arith.mulf %181, %179 : vector<8x128xf32>
    %183 = arith.mulf %173, %155 : vector<8x128xf32>
    %184 = arith.addf %182, %183 : vector<8x128xf32>
    %c6_i32 = arith.constant 6 : i32
    %c8_i32_63 = arith.constant 8 : i32
    %185 = arith.muli %c6_i32, %c8_i32_63 : i32
    %186 = tpu.assume_multiple %185, 8 : i32
    %187 = arith.index_cast %186 : i32 to index
    %c0_64 = arith.constant 0 : index
    %188 = vector.load %arg8[%187, %c0_64] : memref<64x384xf32, #tpu.memory_space<vmem>>, vector<8x384xf32>
    %c0_65 = arith.constant 0 : index
    %c0_66 = arith.constant 0 : index
    %189 = vector.load %arg2[%c0_65, %c0_66] : memref<128x384xf32, #tpu.memory_space<vmem>>, vector<128x384xf32>
    %cst_67 = arith.constant dense<0.000000e+00> : vector<8x384xf32>
    %190 = tpu.matmul %184, %189, %cst_67 {dimension_numbers = #tpu.dot_dimension_numbers<[1], [0], [0], [1], [0, 0, 1, 1], [], []>} : vector<8x128xf32>, vector<128x384xf32>, vector<8x384xf32> -> vector<8x384xf32>
    %191 = vector.extract_strided_slice %188 {offsets = [0, 0], sizes = [8, 256], strides = [1, 1]} : vector<8x384xf32> to vector<8x256xf32>
    %192 = vector.extract_strided_slice %190 {offsets = [0, 0], sizes = [8, 256], strides = [1, 1]} : vector<8x384xf32> to vector<8x256xf32>
    %193 = arith.addf %191, %192 : vector<8x256xf32>
    %cst_68 = arith.constant 5.000000e-01 : f32
    %194 = vector.broadcast %cst_68 : f32 to vector<8x256xf32>
    %195 = arith.mulf %194, %193 : vector<8x256xf32>
    %196 = math.tanh %195 : vector<8x256xf32>
    %cst_69 = arith.constant 1.000000e+00 : f32
    %197 = vector.broadcast %cst_69 : f32 to vector<8x256xf32>
    %198 = arith.addf %196, %197 : vector<8x256xf32>
    %cst_70 = arith.constant 5.000000e-01 : f32
    %199 = vector.broadcast %cst_70 : f32 to vector<8x256xf32>
    %200 = arith.mulf %199, %198 : vector<8x256xf32>
    %201 = vector.extract_strided_slice %200 {offsets = [0, 0], sizes = [8, 128], strides = [1, 1]} : vector<8x256xf32> to vector<8x128xf32>
    %202 = vector.extract_strided_slice %200 {offsets = [0, 128], sizes = [8, 128], strides = [1, 1]} : vector<8x256xf32> to vector<8x128xf32>
    %203 = vector.extract_strided_slice %188 {offsets = [0, 256], sizes = [8, 128], strides = [1, 1]} : vector<8x384xf32> to vector<8x128xf32>
    %204 = vector.extract_strided_slice %190 {offsets = [0, 256], sizes = [8, 128], strides = [1, 1]} : vector<8x384xf32> to vector<8x128xf32>
    %205 = arith.addf %204, %9 : vector<8x128xf32>
    %206 = arith.mulf %201, %205 : vector<8x128xf32>
    %207 = arith.addf %203, %206 : vector<8x128xf32>
    %208 = math.tanh %207 : vector<8x128xf32>
    %cst_71 = arith.constant 1.000000e+00 : f32
    %209 = vector.broadcast %cst_71 : f32 to vector<8x128xf32>
    %210 = arith.subf %209, %202 : vector<8x128xf32>
    %211 = arith.mulf %210, %208 : vector<8x128xf32>
    %212 = arith.mulf %202, %184 : vector<8x128xf32>
    %213 = arith.addf %211, %212 : vector<8x128xf32>
    %c7_i32 = arith.constant 7 : i32
    %c8_i32_72 = arith.constant 8 : i32
    %214 = arith.muli %c7_i32, %c8_i32_72 : i32
    %215 = tpu.assume_multiple %214, 8 : i32
    %216 = arith.index_cast %215 : i32 to index
    %c0_73 = arith.constant 0 : index
    %217 = vector.load %arg8[%216, %c0_73] : memref<64x384xf32, #tpu.memory_space<vmem>>, vector<8x384xf32>
    %c0_74 = arith.constant 0 : index
    %c0_75 = arith.constant 0 : index
    %218 = vector.load %arg2[%c0_74, %c0_75] : memref<128x384xf32, #tpu.memory_space<vmem>>, vector<128x384xf32>
    %cst_76 = arith.constant dense<0.000000e+00> : vector<8x384xf32>
    %219 = tpu.matmul %213, %218, %cst_76 {dimension_numbers = #tpu.dot_dimension_numbers<[1], [0], [0], [1], [0, 0, 1, 1], [], []>} : vector<8x128xf32>, vector<128x384xf32>, vector<8x384xf32> -> vector<8x384xf32>
    %220 = vector.extract_strided_slice %217 {offsets = [0, 0], sizes = [8, 256], strides = [1, 1]} : vector<8x384xf32> to vector<8x256xf32>
    %221 = vector.extract_strided_slice %219 {offsets = [0, 0], sizes = [8, 256], strides = [1, 1]} : vector<8x384xf32> to vector<8x256xf32>
    %222 = arith.addf %220, %221 : vector<8x256xf32>
    %cst_77 = arith.constant 5.000000e-01 : f32
    %223 = vector.broadcast %cst_77 : f32 to vector<8x256xf32>
    %224 = arith.mulf %223, %222 : vector<8x256xf32>
    %225 = math.tanh %224 : vector<8x256xf32>
    %cst_78 = arith.constant 1.000000e+00 : f32
    %226 = vector.broadcast %cst_78 : f32 to vector<8x256xf32>
    %227 = arith.addf %225, %226 : vector<8x256xf32>
    %cst_79 = arith.constant 5.000000e-01 : f32
    %228 = vector.broadcast %cst_79 : f32 to vector<8x256xf32>
    %229 = arith.mulf %228, %227 : vector<8x256xf32>
    %230 = vector.extract_strided_slice %229 {offsets = [0, 0], sizes = [8, 128], strides = [1, 1]} : vector<8x256xf32> to vector<8x128xf32>
    %231 = vector.extract_strided_slice %229 {offsets = [0, 128], sizes = [8, 128], strides = [1, 1]} : vector<8x256xf32> to vector<8x128xf32>
    %232 = vector.extract_strided_slice %217 {offsets = [0, 256], sizes = [8, 128], strides = [1, 1]} : vector<8x384xf32> to vector<8x128xf32>
    %233 = vector.extract_strided_slice %219 {offsets = [0, 256], sizes = [8, 128], strides = [1, 1]} : vector<8x384xf32> to vector<8x128xf32>
    %234 = arith.addf %233, %9 : vector<8x128xf32>
    %235 = arith.mulf %230, %234 : vector<8x128xf32>
    %236 = arith.addf %232, %235 : vector<8x128xf32>
    %237 = math.tanh %236 : vector<8x128xf32>
    %cst_80 = arith.constant 1.000000e+00 : f32
    %238 = vector.broadcast %cst_80 : f32 to vector<8x128xf32>
    %239 = arith.subf %238, %231 : vector<8x128xf32>
    %240 = arith.mulf %239, %237 : vector<8x128xf32>
    %241 = arith.mulf %231, %213 : vector<8x128xf32>
    %242 = arith.addf %240, %241 : vector<8x128xf32>
    %c8_i32_81 = arith.constant 8 : i32
    %c0_82 = arith.constant 0 : index
    %c0_83 = arith.constant 0 : index
    %243 = vector.load %arg5[%c0_82, %c0_83] : memref<128x128xf32, #tpu.memory_space<vmem>>, vector<128x128xf32>
    %cst_84 = arith.constant dense<0.000000e+00> : vector<8x128xf32>
    %244 = tpu.matmul %242, %243, %cst_84 {dimension_numbers = #tpu.dot_dimension_numbers<[1], [0], [0], [1], [0, 0, 1, 1], [], []>} : vector<8x128xf32>, vector<128x128xf32>, vector<8x128xf32> -> vector<8x128xf32>
    %c0_85 = arith.constant 0 : index
    %c0_86 = arith.constant 0 : index
    %245 = vector.load %arg6[%c0_85, %c0_86] : memref<1x128xf32, #tpu.memory_space<vmem>>, vector<1x128xf32>
    %246 = vector.broadcast %245 : vector<1x128xf32> to vector<8x128xf32>
    %247 = arith.addf %244, %246 : vector<8x128xf32>
    %cst_87 = arith.constant 5.000000e-01 : f32
    %248 = vector.broadcast %cst_87 : f32 to vector<8x128xf32>
    %249 = arith.mulf %248, %247 : vector<8x128xf32>
    %250 = math.tanh %249 : vector<8x128xf32>
    %cst_88 = arith.constant 1.000000e+00 : f32
    %251 = vector.broadcast %cst_88 : f32 to vector<8x128xf32>
    %252 = arith.addf %250, %251 : vector<8x128xf32>
    %cst_89 = arith.constant 5.000000e-01 : f32
    %253 = vector.broadcast %cst_89 : f32 to vector<8x128xf32>
    %254 = arith.mulf %253, %252 : vector<8x128xf32>
    %c0_90 = arith.constant 0 : index
    %c0_91 = arith.constant 0 : index
    %255 = vector.load %arg7[%c0_90, %c0_91] : memref<8x128xf32, #tpu.memory_space<vmem>>, vector<8x128xf32>
    tpu.vector_store %arg7[%c0_90, %c0_91], %254 {strides = array<i32>} : memref<8x128xf32, #tpu.memory_space<vmem>>, vector<8x128xf32>,
    return
  }
}

</mosaic_0001>

<llo_original>
// kernel: tpu_custom_call.1
$region0: #{tpu_custom_call.1}
  #allocation0 [shape = 'u32[]', space=smem, size = 0x4, offset = 0x4, fixed_abs, tag = 'smem constant byte address 0x4 - core index']
  #allocation1 [shape = 'u32[144,128]{1,0:T(1,128)}', space=vmem, size = 0x12000, scoped, tag = 'internal scratch']
  #allocation2 [shape = 'f32[64,384]{1,0:T(8,128)}', space=vmem, size = 0x18000, scoped, tag = 'scratch operand']
  %s0 = inlined_call_operand.vmem [shape: f32[64,1], index: 0, kind: input, shape index: {}]
  %s1 = inlined_call_operand.vmem [shape: f32[1,384], index: 1, kind: input, shape index: {}]
  %s2 = inlined_call_operand.hbm [shape: f32[128,384], index: 2, kind: input, shape index: {}]
  %s3 = inlined_call_operand.vmem [shape: f32[1,384], index: 3, kind: input, shape index: {}]
  %s4 = inlined_call_operand.vmem [shape: f32[1,128], index: 4, kind: input, shape index: {}]
  %s5 = inlined_call_operand.hbm [shape: f32[128,128], index: 5, kind: input, shape index: {}]
  %s6 = inlined_call_operand.vmem [shape: f32[1,128], index: 6, kind: input, shape index: {}]
  %s7 = inlined_call_operand.hbm [shape: f32[8,128], index: 7, kind: output, shape index: {}]
  %s8 = sld [smem:[#allocation0]]
  $region46: #{tpu_custom_call.1} parent=0
    _
  %s10 = ssub.s32 1, %s8
  %s11 = scalar_select 0, %s10, %s8
  $region1: #{tpu_custom_call.1} parent=0
    #allocation3 [shape = 'u8[196608]{0}', space=vmem, size = 0x30000, scoped, tag = 'input window, operand 2, single buffered']
    #allocation4 [shape = 's32[1]{0}', space=sflag, size = 0x4, scoped, tag = 'scoped memory for tpu_custom_call.1']
    #allocation5 [shape = 's32[1]{0}', space=sflag, size = 0x4, scoped, tag = 'scoped memory for tpu_custom_call.1']
    #allocation6 [shape = 'u8[65536]{0}', space=vmem, size = 0x10000, scoped, tag = 'input window, operand 5, single buffered']
    #allocation7 [shape = 's32[1]{0}', space=sflag, size = 0x4, scoped, tag = 'scoped memory for tpu_custom_call.1']
    #allocation8 [shape = 'u8[4096]{0}', space=vmem, size = 0x1000, scoped, tag = 'output window, operand 0, single buffered']
    %12 = vsyncpa [#allocation4], 0
    %13 = vsyncpa [#allocation7], 0
    %14 = vsyncpa [#allocation5], 0
    // Predicated region
    $region2: #{tpu_custom_call.1} parent=1 // pred_check
      _
    $region3: #{tpu_custom_call.1} parent=1 // pred_check_branch
      %16 = sbr.rel (0) target = $region5
    $region4: #{tpu_custom_call.1} parent=1 // pred_region
      _
    $region5: #{tpu_custom_call.1} parent=1 // pred_fallthru
      _
    // Predicated region
    $region6: #{tpu_custom_call.1} parent=1 // pred_check
      _
    $region7: #{tpu_custom_call.1} parent=1 // pred_check_branch
      %18 = sbr.rel (0) target = $region9
    $region8: #{tpu_custom_call.1} parent=1 // pred_region
      _
    $region9: #{tpu_custom_call.1} parent=1 // pred_fallthru
      _
    // Predicated region
    $region10: #{tpu_custom_call.1} parent=1 // pred_check
      _
    $region11: #{tpu_custom_call.1} parent=1 // pred_check_branch
      %20 = sbr.rel (0) target = $region13
    $region12: #{tpu_custom_call.1} parent=1 // pred_region
      %s22 = ssub.s32 6144, 6144
      %23 = vsyncadd [#allocation4], %s22
      %s24 = sshll.u32 [#allocation3], 4
      %s25 = int_to_ptr.vmem [resolvable:$true] %s24
      %30 = dma.hbm_to_vmem [thread:$0]  %s2, 6144, %s25, [#allocation4], 384, 384, 24
    $region13: #{tpu_custom_call.1} parent=1 // pred_fallthru
      _
    // Predicated region
    $region14: #{tpu_custom_call.1} parent=1 // pred_check
      _
    $region15: #{tpu_custom_call.1} parent=1 // pred_check_branch
      %32 = sbr.rel (0) target = $region17
    $region16: #{tpu_custom_call.1} parent=1 // pred_region
      _
    $region17: #{tpu_custom_call.1} parent=1 // pred_fallthru
      _
    // Predicated region
    $region18: #{tpu_custom_call.1} parent=1 // pred_check
      _
    $region19: #{tpu_custom_call.1} parent=1 // pred_check_branch
      %34 = sbr.rel (0) target = $region21
    $region20: #{tpu_custom_call.1} parent=1 // pred_region
      _
    $region21: #{tpu_custom_call.1} parent=1 // pred_fallthru
      _
    // Predicated region
    $region22: #{tpu_custom_call.1} parent=1 // pred_check
      _
    $region23: #{tpu_custom_call.1} parent=1 // pred_check_branch
      %36 = sbr.rel (0) target = $region25
    $region24: #{tpu_custom_call.1} parent=1 // pred_region
      %s38 = ssub.s32 2048, 2048
      %39 = vsyncadd [#allocation7], %s38
      %s40 = sshll.u32 [#allocation6], 4
      %s41 = int_to_ptr.vmem [resolvable:$true] %s40
      %46 = dma.hbm_to_vmem [thread:$0]  %s5, 2048, %s41, [#allocation7], 128, 128, 8
    $region25: #{tpu_custom_call.1} parent=1 // pred_fallthru
      _
    // Predicated region
    $region26: #{tpu_custom_call.1} parent=1 // pred_check
      _
    $region27: #{tpu_custom_call.1} parent=1 // pred_check_branch
      %48 = sbr.rel (0) target = $region29
    $region28: #{tpu_custom_call.1} parent=1 // pred_region
      _
    $region29: #{tpu_custom_call.1} parent=1 // pred_fallthru
      _
    // Predicated region
    $region30: #{tpu_custom_call.1} parent=1 // pred_check
      _
    $region31: #{tpu_custom_call.1} parent=1 // pred_check_branch
      %50 = sbr.rel (0) target = $region33
    $region32: #{tpu_custom_call.1} parent=1 // pred_region
      %51 = dma.done [#allocation4], 6144
    $region33: #{tpu_custom_call.1} parent=1 // pred_fallthru
      _
    // Predicated region
    $region34: #{tpu_custom_call.1} parent=1 // pred_check
      _
    $region35: #{tpu_custom_call.1} parent=1 // pred_check_branch
      %53 = sbr.rel (0) target = $region37
    $region36: #{tpu_custom_call.1} parent=1 // pred_region
      %54 = dma.done [#allocation7], 2048
    $region37: #{tpu_custom_call.1} parent=1 // pred_fallthru
      _
    %v55 = vld [vmem:[%s0] sm:$0xff]
    %v56 = vld [vmem:[%s0 + $0x8] sm:$0xff]
    %v57 = vld [vmem:[%s0 + $0x10] sm:$0xff]
    %v58 = vld [vmem:[%s0 + $0x18] sm:$0xff]
    %v59 = vld [vmem:[%s0 + $0x20] sm:$0xff]
    %v60 = vld [vmem:[%s0 + $0x28] sm:$0xff]
    %v61 = vld [vmem:[%s0 + $0x30] sm:$0xff]
    %v62 = vld [vmem:[%s0 + $0x38] sm:$0xff]
    %v63 = vld [vmem:[%s1] sm:$0x7]
    %v64 = vld [vmem:[%s3] sm:$0x7]
    %v66 = vlaneseq
    %v67 = vshrl.u32 %v66, 7
    %v68 = vsub.s32 0, %v67
    %v69 = vrot.slane %v64, %v68
    %v70 = vlaneseq
    %v71 = vshrl.u32 %v70, 7
    %v72 = vsub.s32 1, %v71
    %v73 = vrot.slane %v64, %v72
    %v74 = vlaneseq
    %v75 = vshrl.u32 %v74, 7
    %v76 = vsub.s32 2, %v75
    %v77 = vrot.slane %v64, %v76
    %v82 = vlaneseq
    %v83 = vshrl.u32 %v82, 7
    %v84 = vsub.s32 0, %v83
    %v85 = vrot.slane %v63, %v84
    %v86 = vlaneseq
    %v87 = vshrl.u32 %v86, 7
    %v88 = vsub.s32 1, %v87
    %v89 = vrot.slane %v63, %v88
    %v90 = vlaneseq
    %v91 = vshrl.u32 %v90, 7
    %v92 = vsub.s32 2, %v91
    %v93 = vrot.slane %v63, %v92
    %vm94 = vcmask 7168
    %v96 = vsel %vm94, %v55, 0
    %v99 = vsel %vm94, %v56, 0
    %v102 = vsel %vm94, %v57, 0
    %v105 = vsel %vm94, %v58, 0
    %v108 = vsel %vm94, %v59, 0
    %v111 = vsel %vm94, %v60, 0
    %v114 = vsel %vm94, %v61, 0
    %v117 = vsel %vm94, %v62, 0
    %vm119 = vcmask 1040384
    %v120 = vsel %vm119, %v85, 0
    %v122 = vsel %vm119, %v89, 0
    %v124 = vsel %vm119, %v93, 0
    %126 = vmatprep.subr.mxu0 0.0
    %127 = vmatpush1.msra.mxu0 0.0
    %128 = vmatprep.subr.mxu0 0.0
    %129 = vmatpush1.msra.mxu0 0.0
    %130 = vmatprep.subr.mxu0 0.0
    %131 = vmatpush1.msra.mxu0 0.0
    %132 = vmatprep.subr.mxu0 0.0
    %133 = vmatpush1.msra.mxu0 0.0
    %134 = vmatprep.subr.mxu0 0.0
    %135 = vmatpush1.msra.mxu0 0.0
    %136 = vmatprep.subr.mxu0 0.0
    %137 = vmatpush1.msra.mxu0 0.0
    %138 = vmatprep.subr.mxu0 0.0
    %139 = vmatpush1.msra.mxu0 0.0
    %140 = vmatprep.subr.mxu0 0.0
    %141 = vmatpush1.msra.mxu0 0.0
    %142 = vmatprep.subr.mxu0 0.0
    %143 = vmatpush1.msra.mxu0 0.0
    %144 = vmatprep.subr.mxu0 0.0
    %145 = vmatpush1.msra.mxu0 0.0
    %146 = vmatprep.subr.mxu0 0.0
    %147 = vmatpush1.msra.mxu0 0.0
    %148 = vmatprep.subr.mxu0 0.0
    %149 = vmatpush1.msra.mxu0 0.0
    %150 = vmatprep.subr.mxu0 0.0
    %151 = vmatpush1.msra.mxu0 0.0
    %152 = vmatprep.subr.mxu0 0.0
    %153 = vmatpush1.msra.mxu0 0.0
    %154 = vmatprep.subr.mxu0 0.0
    %155 = vmatpush1.msra.mxu0 0.0
    %156 = vmatprep.subr.mxu0 %v122
    %157 = vmatpush1.msra.mxu0 %v120
    %158 = vmatprep.subr.mxu0 0.0
    %159 = vmatpush2.msra.mxu0 0.0
    %160 = vmatprep.subr.mxu0 0.0
    %161 = vmatpush2.msra.mxu0 0.0
    %162 = vmatprep.subr.mxu0 0.0
    %163 = vmatpush2.msra.mxu0 0.0
    %164 = vmatprep.subr.mxu0 0.0
    %165 = vmatpush2.msra.mxu0 0.0
    %166 = vmatprep.subr.mxu0 0.0
    %167 = vmatpush2.msra.mxu0 0.0
    %168 = vmatprep.subr.mxu0 0.0
    %169 = vmatpush2.msra.mxu0 0.0
    %170 = vmatprep.subr.mxu0 0.0
    %171 = vmatpush2.msra.mxu0 0.0
    %172 = vmatprep.subr.mxu0 0.0
    %173 = vmatpush2.msra.mxu0 0.0
    %174 = vmatprep.subr.mxu0 0.0
    %175 = vmatpush2.msra.mxu0 0.0
    %176 = vmatprep.subr.mxu0 0.0
    %177 = vmatpush2.msra.mxu0 0.0
    %178 = vmatprep.subr.mxu0 0.0
    %179 = vmatpush2.msra.mxu0 0.0
    %180 = vmatprep.subr.mxu0 0.0
    %181 = vmatpush2.msra.mxu0 0.0
    %182 = vmatprep.subr.mxu0 0.0
    %183 = vmatpush2.msra.mxu0 0.0
    %184 = vmatprep.subr.mxu0 0.0
    %185 = vmatpush2.msra.mxu0 0.0
    %186 = vmatprep.subr.mxu0 0.0
    %187 = vmatpush2.msra.mxu0 0.0
    %188 = vmatprep.subr.mxu0 0.0
    %189 = vmatpush2.msra.mxu0 0.0
    %190 = vmatprep.mubr.f32.mxu0 0.0
    %191 = vmatmul.mubr.f32.gmra.mxu0 %v96
    %v192 = vpop.f32.mrf.mxu0
    %v193 = vadd.f32 %v69, %v192
    %v194 = vpop.f32.mrf.mxu0
    %v195 = vadd.f32 %v73, %v194
    %196 = vmatprep.mubr.f32.mxu0 0.0
    %197 = vmatmul.mubr.f32.gmra.mxu0 %v99
    %v198 = vpop.f32.mrf.mxu0
    %v199 = vadd.f32 %v69, %v198
    %v200 = vpop.f32.mrf.mxu0
    %v201 = vadd.f32 %v73, %v200
    %202 = vmatprep.mubr.f32.mxu0 0.0
    %203 = vmatmul.mubr.f32.gmra.mxu0 %v102
    %v204 = vpop.f32.mrf.mxu0
    %v205 = vadd.f32 %v69, %v204
    %v206 = vpop.f32.mrf.mxu0
    %v207 = vadd.f32 %v73, %v206
    %208 = vmatprep.mubr.f32.mxu0 0.0
    %209 = vmatmul.mubr.f32.gmra.mxu0 %v105
    %v210 = vpop.f32.mrf.mxu0
    %v211 = vadd.f32 %v69, %v210
    %v212 = vpop.f32.mrf.mxu0
    %v213 = vadd.f32 %v73, %v212
    %214 = vmatprep.mubr.f32.mxu0 0.0
    %215 = vmatmul.mubr.f32.gmra.mxu0 %v108
    %v216 = vpop.f32.mrf.mxu0
    %v217 = vadd.f32 %v69, %v216
    %v218 = vpop.f32.mrf.mxu0
    %v219 = vadd.f32 %v73, %v218
    %220 = vmatprep.mubr.f32.mxu0 0.0
    %221 = vmatmul.mubr.f32.gmra.mxu0 %v111
    %v222 = vpop.f32.mrf.mxu0
    %v223 = vadd.f32 %v69, %v222
    %v224 = vpop.f32.mrf.mxu0
    %v225 = vadd.f32 %v73, %v224
    %226 = vmatprep.mubr.f32.mxu0 0.0
    %227 = vmatmul.mubr.f32.gmra.mxu0 %v114
    %v228 = vpop.f32.mrf.mxu0
    %v229 = vadd.f32 %v69, %v228
    %v230 = vpop.f32.mrf.mxu0
    %v231 = vadd.f32 %v73, %v230
    %232 = vmatprep.mubr.f32.mxu0 0.0
    %233 = vmatmul.mubr.f32.gmra.mxu0 %v117
    %v234 = vpop.f32.mrf.mxu0
    %v235 = vadd.f32 %v69, %v234
    %v236 = vpop.f32.mrf.mxu0
    %v237 = vadd.f32 %v73, %v236
    %238 = vdwg.mxu0
    %239 = vmatprep.subr.mxu0 0.0
    %240 = vmatpush1.msra.mxu0 0.0
    %241 = vmatprep.subr.mxu0 0.0
    %242 = vmatpush1.msra.mxu0 0.0
    %243 = vmatprep.subr.mxu0 0.0
    %244 = vmatpush1.msra.mxu0 0.0
    %245 = vmatprep.subr.mxu0 0.0
    %246 = vmatpush1.msra.mxu0 0.0
    %247 = vmatprep.subr.mxu0 0.0
    %248 = vmatpush1.msra.mxu0 0.0
    %249 = vmatprep.subr.mxu0 0.0
    %250 = vmatpush1.msra.mxu0 0.0
    %251 = vmatprep.subr.mxu0 0.0
    %252 = vmatpush1.msra.mxu0 0.0
    %253 = vmatprep.subr.mxu0 0.0
    %254 = vmatpush1.msra.mxu0 0.0
    %255 = vmatprep.subr.mxu0 0.0
    %256 = vmatpush1.msra.mxu0 0.0
    %257 = vmatprep.subr.mxu0 0.0
    %258 = vmatpush1.msra.mxu0 0.0
    %259 = vmatprep.subr.mxu0 0.0
    %260 = vmatpush1.msra.mxu0 0.0
    %261 = vmatprep.subr.mxu0 0.0
    %262 = vmatpush1.msra.mxu0 0.0
    %263 = vmatprep.subr.mxu0 0.0
    %264 = vmatpush1.msra.mxu0 0.0
    %265 = vmatprep.subr.mxu0 0.0
    %266 = vmatpush1.msra.mxu0 0.0
    %267 = vmatprep.subr.mxu0 0.0
    %268 = vmatpush1.msra.mxu0 0.0
    %269 = vmatprep.subr.mxu0 0.0
    %270 = vmatpush1.msra.mxu0 %v124
    %271 = vmatprep.subr.mxu0 0.0
    %272 = vmatpush2.msra.mxu0 0.0
    %273 = vmatprep.subr.mxu0 0.0
    %274 = vmatpush2.msra.mxu0 0.0
    %275 = vmatprep.subr.mxu0 0.0
    %276 = vmatpush2.msra.mxu0 0.0
    %277 = vmatprep.subr.mxu0 0.0
    %278 = vmatpush2.msra.mxu0 0.0
    %279 = vmatprep.subr.mxu0 0.0
    %280 = vmatpush2.msra.mxu0 0.0
    %281 = vmatprep.subr.mxu0 0.0
    %282 = vmatpush2.msra.mxu0 0.0
    %283 = vmatprep.subr.mxu0 0.0
    %284 = vmatpush2.msra.mxu0 0.0
    %285 = vmatprep.subr.mxu0 0.0
    %286 = vmatpush2.msra.mxu0 0.0
    %287 = vmatprep.subr.mxu0 0.0
    %288 = vmatpush2.msra.mxu0 0.0
    %289 = vmatprep.subr.mxu0 0.0
    %290 = vmatpush2.msra.mxu0 0.0
    %291 = vmatprep.subr.mxu0 0.0
    %292 = vmatpush2.msra.mxu0 0.0
    %293 = vmatprep.subr.mxu0 0.0
    %294 = vmatpush2.msra.mxu0 0.0
    %295 = vmatprep.subr.mxu0 0.0
    %296 = vmatpush2.msra.mxu0 0.0
    %297 = vmatprep.subr.mxu0 0.0
    %298 = vmatpush2.msra.mxu0 0.0
    %299 = vmatprep.subr.mxu0 0.0
    %300 = vmatpush2.msra.mxu0 0.0
    %301 = vmatprep.subr.mxu0 0.0
    %302 = vmatpush2.msra.mxu0 0.0
    %303 = vmatprep.mubr.f32.mxu0 0.0
    %304 = vmatmul.mubr.f32.gmra.mxu0 %v96
    %v305 = vpop.f32.mrf.mxu0
    %v306 = vadd.f32 %v77, %v305
    %v307 = vpop.f32.mrf.mxu0
    %308 = vmatprep.mubr.f32.mxu0 0.0
    %309 = vmatmul.mubr.f32.gmra.mxu0 %v99
    %v310 = vpop.f32.mrf.mxu0
    %v311 = vadd.f32 %v77, %v310
    %v312 = vpop.f32.mrf.mxu0
    %313 = vmatprep.mubr.f32.mxu0 0.0
    %314 = vmatmul.mubr.f32.gmra.mxu0 %v102
    %v315 = vpop.f32.mrf.mxu0
    %v316 = vadd.f32 %v77, %v315
    %v317 = vpop.f32.mrf.mxu0
    %318 = vmatprep.mubr.f32.mxu0 0.0
    %319 = vmatmul.mubr.f32.gmra.mxu0 %v105
    %v320 = vpop.f32.mrf.mxu0
    %v321 = vadd.f32 %v77, %v320
    %v322 = vpop.f32.mrf.mxu0
    %323 = vmatprep.mubr.f32.mxu0 0.0
    %324 = vmatmul.mubr.f32.gmra.mxu0 %v108
    %v325 = vpop.f32.mrf.mxu0
    %v326 = vadd.f32 %v77, %v325
    %v327 = vpop.f32.mrf.mxu0
    %328 = vmatprep.mubr.f32.mxu0 0.0
    %329 = vmatmul.mubr.f32.gmra.mxu0 %v111
    %v330 = vpop.f32.mrf.mxu0
    %v331 = vadd.f32 %v77, %v330
    %v332 = vpop.f32.mrf.mxu0
    %333 = vmatprep.mubr.f32.mxu0 0.0
    %334 = vmatmul.mubr.f32.gmra.mxu0 %v114
    %v335 = vpop.f32.mrf.mxu0
    %v336 = vadd.f32 %v77, %v335
    %v337 = vpop.f32.mrf.mxu0
    %338 = vmatprep.mubr.f32.mxu0 0.0
    %339 = vmatmul.mubr.f32.gmra.mxu0 %v117
    %v340 = vpop.f32.mrf.mxu0
    %v341 = vadd.f32 %v77, %v340
    %v342 = vpop.f32.mrf.mxu0
    %343 = vdwg.mxu0
    %344 = vst [vmem:[#allocation2] sm:$0xff] %v193
    %345 = vst [vmem:[#allocation2 + $0x8] sm:$0xff] %v195
    %346 = vst [vmem:[#allocation2 + $0x10] sm:$0xff] %v306
    %347 = vst [vmem:[#allocation2 + $0x18] sm:$0xff] %v199
    %348 = vst [vmem:[#allocation2 + $0x20] sm:$0xff] %v201
    %349 = vst [vmem:[#allocation2 + $0x28] sm:$0xff] %v311
    %350 = vst [vmem:[#allocation2 + $0x30] sm:$0xff] %v205
    %351 = vst [vmem:[#allocation2 + $0x38] sm:$0xff] %v207
    %352 = vst [vmem:[#allocation2 + $0x40] sm:$0xff] %v316
    %353 = vst [vmem:[#allocation2 + $0x48] sm:$0xff] %v211
    %354 = vst [vmem:[#allocation2 + $0x50] sm:$0xff] %v213
    %355 = vst [vmem:[#allocation2 + $0x58] sm:$0xff] %v321
    %356 = vst [vmem:[#allocation2 + $0x60] sm:$0xff] %v217
    %357 = vst [vmem:[#allocation2 + $0x68] sm:$0xff] %v219
    %358 = vst [vmem:[#allocation2 + $0x70] sm:$0xff] %v326
    %359 = vst [vmem:[#allocation2 + $0x78] sm:$0xff] %v223
    %360 = vst [vmem:[#allocation2 + $0x80] sm:$0xff] %v225
    %361 = vst [vmem:[#allocation2 + $0x88] sm:$0xff] %v331
    %362 = vst [vmem:[#allocation2 + $0x90] sm:$0xff] %v229
    %363 = vst [vmem:[#allocation2 + $0x98] sm:$0xff] %v231
    %364 = vst [vmem:[#allocation2 + $0xa0] sm:$0xff] %v336
    %365 = vst [vmem:[#allocation2 + $0xa8] sm:$0xff] %v235
    %366 = vst [vmem:[#allocation2 + $0xb0] sm:$0xff] %v237
    %367 = vst [vmem:[#allocation2 + $0xb8] sm:$0xff] %v341
    %v368 = vld [vmem:[%s4] sm:$0x1]
    %v370 = vlaneseq
    %v371 = vshrl.u32 %v370, 7
    %v372 = vsub.s32 0, %v371
    %v373 = vrot.slane %v368, %v372
    %s375 = smul.u32 0, 3
    %s376 = smul.addr %s375, 8
    %s377 = scalar_lea.vmem [#allocation2], %s376
    %v378 = vld [vmem:[%s377] sm:$0xff]
    %v379 = vld [vmem:[%s377 + $0x8] sm:$0xff]
    %v380 = vld [vmem:[%s377 + $0x10] sm:$0xff]
    %v381 = vld [vmem:[#allocation3] sm:$0xff]
    %v382 = vld [vmem:[#allocation3 + $0x8] sm:$0xff]
    %v383 = vld [vmem:[#allocation3 + $0x10] sm:$0xff]
    %v384 = vld [vmem:[#allocation3 + $0x18] sm:$0xff]
    %v385 = vld [vmem:[#allocation3 + $0x20] sm:$0xff]
    %v386 = vld [vmem:[#allocation3 + $0x28] sm:$0xff]
    %v387 = vld [vmem:[#allocation3 + $0x30] sm:$0xff]
    %v388 = vld [vmem:[#allocation3 + $0x38] sm:$0xff]
    %v389 = vld [vmem:[#allocation3 + $0x40] sm:$0xff]
    %v390 = vld [vmem:[#allocation3 + $0x48] sm:$0xff]
    %v391 = vld [vmem:[#allocation3 + $0x50] sm:$0xff]
    %v392 = vld [vmem:[#allocation3 + $0x58] sm:$0xff]
    %v393 = vld [vmem:[#allocation3 + $0x60] sm:$0xff]
    %v394 = vld [vmem:[#allocation3 + $0x68] sm:$0xff]
    %v395 = vld [vmem:[#allocation3 + $0x70] sm:$0xff]
    %v396 = vld [vmem:[#allocation3 + $0x78] sm:$0xff]
    %v397 = vld [vmem:[#allocation3 + $0x80] sm:$0xff]
    %v398 = vld [vmem:[#allocation3 + $0x88] sm:$0xff]
    %v399 = vld [vmem:[#allocation3 + $0x90] sm:$0xff]
    %v400 = vld [vmem:[#allocation3 + $0x98] sm:$0xff]
    %v401 = vld [vmem:[#allocation3 + $0xa0] sm:$0xff]
    %v402 = vld [vmem:[#allocation3 + $0xa8] sm:$0xff]
    %v403 = vld [vmem:[#allocation3 + $0xb0] sm:$0xff]
    %v404 = vld [vmem:[#allocation3 + $0xb8] sm:$0xff]
    %v405 = vld [vmem:[#allocation3 + $0xc0] sm:$0xff]
    %v406 = vld [vmem:[#allocation3 + $0xc8] sm:$0xff]
    %v407 = vld [vmem:[#allocation3 + $0xd0] sm:$0xff]
    %v408 = vld [vmem:[#allocation3 + $0xd8] sm:$0xff]
    %v409 = vld [vmem:[#allocation3 + $0xe0] sm:$0xff]
    %v410 = vld [vmem:[#allocation3 + $0xe8] sm:$0xff]
    %v411 = vld [vmem:[#allocation3 + $0xf0] sm:$0xff]
    %v412 = vld [vmem:[#allocation3 + $0xf8] sm:$0xff]
    %v413 = vld [vmem:[#allocation3 + $0x100] sm:$0xff]
    %v414 = vld [vmem:[#allocation3 + $0x108] sm:$0xff]
    %v415 = vld [vmem:[#allocation3 + $0x110] sm:$0xff]
    %v416 = vld [vmem:[#allocation3 + $0x118] sm:$0xff]
    %v417 = vld [vmem:[#allocation3 + $0x120] sm:$0xff]
    %v418 = vld [vmem:[#allocation3 + $0x128] sm:$0xff]
    %v419 = vld [vmem:[#allocation3 + $0x130] sm:$0xff]
    %v420 = vld [vmem:[#allocation3 + $0x138] sm:$0xff]
    %v421 = vld [vmem:[#allocation3 + $0x140] sm:$0xff]
    %v422 = vld [vmem:[#allocation3 + $0x148] sm:$0xff]
    %v423 = vld [vmem:[#allocation3 + $0x150] sm:$0xff]
    %v424 = vld [vmem:[#allocation3 + $0x158] sm:$0xff]
    %v425 = vld [vmem:[#allocation3 + $0x160] sm:$0xff]
    %v426 = vld [vmem:[#allocation3 + $0x168] sm:$0xff]
    %v427 = vld [vmem:[#allocation3 + $0x170] sm:$0xff]
    %v428 = vld [vmem:[#allocation3 + $0x178] sm:$0xff]
    %429 = vmatprep.subr.mxu0 %v427
    %430 = vmatpush1.msra.mxu0 %v426
    %431 = vmatprep.subr.mxu0 %v424
    %432 = vmatpush1.msra.mxu0 %v423
    %433 = vmatprep.subr.mxu0 %v421
    %434 = vmatpush1.msra.mxu0 %v420
    %435 = vmatprep.subr.mxu0 %v418
    %436 = vmatpush1.msra.mxu0 %v417
    %437 = vmatprep.subr.mxu0 %v415
    %438 = vmatpush1.msra.mxu0 %v414
    %439 = vmatprep.subr.mxu0 %v412
    %440 = vmatpush1.msra.mxu0 %v411
    %441 = vmatprep.subr.mxu0 %v409
    %442 = vmatpush1.msra.mxu0 %v408
    %443 = vmatprep.subr.mxu0 %v406
    %444 = vmatpush1.msra.mxu0 %v405
    %445 = vmatprep.subr.mxu0 %v403
    %446 = vmatpush1.msra.mxu0 %v402
    %447 = vmatprep.subr.mxu0 %v400
    %448 = vmatpush1.msra.mxu0 %v399
    %449 = vmatprep.subr.mxu0 %v397
    %450 = vmatpush1.msra.mxu0 %v396
    %451 = vmatprep.subr.mxu0 %v394
    %452 = vmatpush1.msra.mxu0 %v393
    %453 = vmatprep.subr.mxu0 %v391
    %454 = vmatpush1.msra.mxu0 %v390
    %455 = vmatprep.subr.mxu0 %v388
    %456 = vmatpush1.msra.mxu0 %v387
    %457 = vmatprep.subr.mxu0 %v385
    %458 = vmatpush1.msra.mxu0 %v384
    %459 = vmatprep.subr.mxu0 %v382
    %460 = vmatpush1.msra.mxu0 %v381
    %461 = vmatprep.subr.mxu0 0.0
    %462 = vmatpush2.msra.mxu0 0.0
    %463 = vmatprep.subr.mxu0 0.0
    %464 = vmatpush2.msra.mxu0 0.0
    %465 = vmatprep.subr.mxu0 0.0
    %466 = vmatpush2.msra.mxu0 0.0
    %467 = vmatprep.subr.mxu0 0.0
    %468 = vmatpush2.msra.mxu0 0.0
    %469 = vmatprep.subr.mxu0 0.0
    %470 = vmatpush2.msra.mxu0 0.0
    %471 = vmatprep.subr.mxu0 0.0
    %472 = vmatpush2.msra.mxu0 0.0
    %473 = vmatprep.subr.mxu0 0.0
    %474 = vmatpush2.msra.mxu0 0.0
    %475 = vmatprep.subr.mxu0 0.0
    %476 = vmatpush2.msra.mxu0 0.0
    %477 = vmatprep.subr.mxu0 0.0
    %478 = vmatpush2.msra.mxu0 0.0
    %479 = vmatprep.subr.mxu0 0.0
    %480 = vmatpush2.msra.mxu0 0.0
    %481 = vmatprep.subr.mxu0 0.0
    %482 = vmatpush2.msra.mxu0 0.0
    %483 = vmatprep.subr.mxu0 0.0
    %484 = vmatpush2.msra.mxu0 0.0
    %485 = vmatprep.subr.mxu0 0.0
    %486 = vmatpush2.msra.mxu0 0.0
    %487 = vmatprep.subr.mxu0 0.0
    %488 = vmatpush2.msra.mxu0 0.0
    %489 = vmatprep.subr.mxu0 0.0
    %490 = vmatpush2.msra.mxu0 0.0
    %491 = vmatprep.subr.mxu0 0.0
    %492 = vmatpush2.msra.mxu0 0.0
    %493 = vmatprep.mubr.f32.mxu0 0.0
    %494 = vmatmul.mubr.f32.gmra.mxu0 0.0
    %v495 = vpop.f32.mrf.mxu0
    %v496 = vadd.f32 0.0, %v495
    %v497 = vpop.f32.mrf.mxu0
    %v498 = vadd.f32 0.0, %v497
    %499 = vdwg.mxu0
    %500 = vmatprep.subr.mxu0 0.0
    %501 = vmatpush1.msra.mxu0 %v428
    %502 = vmatprep.subr.mxu0 0.0
    %503 = vmatpush1.msra.mxu0 %v425
    %504 = vmatprep.subr.mxu0 0.0
    %505 = vmatpush1.msra.mxu0 %v422
    %506 = vmatprep.subr.mxu0 0.0
    %507 = vmatpush1.msra.mxu0 %v419
    %508 = vmatprep.subr.mxu0 0.0
    %509 = vmatpush1.msra.mxu0 %v416
    %510 = vmatprep.subr.mxu0 0.0
    %511 = vmatpush1.msra.mxu0 %v413
    %512 = vmatprep.subr.mxu0 0.0
    %513 = vmatpush1.msra.mxu0 %v410
    %514 = vmatprep.subr.mxu0 0.0
    %515 = vmatpush1.msra.mxu0 %v407
    %516 = vmatprep.subr.mxu0 0.0
    %517 = vmatpush1.msra.mxu0 %v404
    %518 = vmatprep.subr.mxu0 0.0
    %519 = vmatpush1.msra.mxu0 %v401
    %520 = vmatprep.subr.mxu0 0.0
    %521 = vmatpush1.msra.mxu0 %v398
    %522 = vmatprep.subr.mxu0 0.0
    %523 = vmatpush1.msra.mxu0 %v395
    %524 = vmatprep.subr.mxu0 0.0
    %525 = vmatpush1.msra.mxu0 %v392
    %526 = vmatprep.subr.mxu0 0.0
    %527 = vmatpush1.msra.mxu0 %v389
    %528 = vmatprep.subr.mxu0 0.0
    %529 = vmatpush1.msra.mxu0 %v386
    %530 = vmatprep.subr.mxu0 0.0
    %531 = vmatpush1.msra.mxu0 %v383
    %532 = vmatprep.subr.mxu0 0.0
    %533 = vmatpush2.msra.mxu0 0.0
    %534 = vmatprep.subr.mxu0 0.0
    %535 = vmatpush2.msra.mxu0 0.0
    %536 = vmatprep.subr.mxu0 0.0
    %537 = vmatpush2.msra.mxu0 0.0
    %538 = vmatprep.subr.mxu0 0.0
    %539 = vmatpush2.msra.mxu0 0.0
    %540 = vmatprep.subr.mxu0 0.0
    %541 = vmatpush2.msra.mxu0 0.0
    %542 = vmatprep.subr.mxu0 0.0
    %543 = vmatpush2.msra.mxu0 0.0
    %544 = vmatprep.subr.mxu0 0.0
    %545 = vmatpush2.msra.mxu0 0.0
    %546 = vmatprep.subr.mxu0 0.0
    %547 = vmatpush2.msra.mxu0 0.0
    %548 = vmatprep.subr.mxu0 0.0
    %549 = vmatpush2.msra.mxu0 0.0
    %550 = vmatprep.subr.mxu0 0.0
    %551 = vmatpush2.msra.mxu0 0.0
    %552 = vmatprep.subr.mxu0 0.0
    %553 = vmatpush2.msra.mxu0 0.0
    %554 = vmatprep.subr.mxu0 0.0
    %555 = vmatpush2.msra.mxu0 0.0
    %556 = vmatprep.subr.mxu0 0.0
    %557 = vmatpush2.msra.mxu0 0.0
    %558 = vmatprep.subr.mxu0 0.0
    %559 = vmatpush2.msra.mxu0 0.0
    %560 = vmatprep.subr.mxu0 0.0
    %561 = vmatpush2.msra.mxu0 0.0
    %562 = vmatprep.subr.mxu0 0.0
    %563 = vmatpush2.msra.mxu0 0.0
    %564 = vmatprep.mubr.f32.mxu0 0.0
    %565 = vmatmul.mubr.f32.gmra.mxu0 0.0
    %v566 = vpop.f32.mrf.mxu0
    %v567 = vadd.f32 0.0, %v566
    %v568 = vpop.f32.mrf.mxu0
    %569 = vdwg.mxu0
    %v570 = vadd.f32 %v378, %v496
    %v571 = vadd.f32 %v379, %v498
    %v572 = vmul.f32 %v570, 0.5
    %v573 = vmul.f32 %v571, 0.5
    %v574 = vtanh.pop %v572
    %v575 = vtanh.pop %v573
    %v576 = vadd.f32 %v574, 1.0
    %v577 = vadd.f32 %v575, 1.0
    %v578 = vmul.f32 %v576, 0.5
    %v579 = vmul.f32 %v577, 0.5
    %v580 = vadd.f32 %v567, %v373
    %v581 = vmul.f32 %v578, %v580
    %v582 = vadd.f32 %v380, %v581
    %v583 = vtanh.pop %v582
    %v584 = vsub.f32 1.0, %v579
    %v585 = vmul.f32 %v584, %v583
    %v586 = vmul.f32 %v579, 0.0
    %v587 = vadd.f32 %v585, %v586
    %s588 = smul.u32 1, 3
    %s589 = smul.addr %s588, 8
    %s590 = scalar_lea.vmem [#allocation2], %s589
    %v591 = vld [vmem:[%s590] sm:$0xff]
    %v592 = vld [vmem:[%s590 + $0x8] sm:$0xff]
    %v593 = vld [vmem:[%s590 + $0x10] sm:$0xff]
    %594 = vmatprep.subr.mxu0 %v427
    %595 = vmatpush1.msra.mxu0 %v426
    %596 = vmatprep.subr.mxu0 %v424
    %597 = vmatpush1.msra.mxu0 %v423
    %598 = vmatprep.subr.mxu0 %v421
    %599 = vmatpush1.msra.mxu0 %v420
    %600 = vmatprep.subr.mxu0 %v418
    %601 = vmatpush1.msra.mxu0 %v417
    %602 = vmatprep.subr.mxu0 %v415
    %603 = vmatpush1.msra.mxu0 %v414
    %604 = vmatprep.subr.mxu0 %v412
    %605 = vmatpush1.msra.mxu0 %v411
    %606 = vmatprep.subr.mxu0 %v409
    %607 = vmatpush1.msra.mxu0 %v408
    %608 = vmatprep.subr.mxu0 %v406
    %609 = vmatpush1.msra.mxu0 %v405
    %610 = vmatprep.subr.mxu0 %v403
    %611 = vmatpush1.msra.mxu0 %v402
    %612 = vmatprep.subr.mxu0 %v400
    %613 = vmatpush1.msra.mxu0 %v399
    %614 = vmatprep.subr.mxu0 %v397
    %615 = vmatpush1.msra.mxu0 %v396
    %616 = vmatprep.subr.mxu0 %v394
    %617 = vmatpush1.msra.mxu0 %v393
    %618 = vmatprep.subr.mxu0 %v391
    %619 = vmatpush1.msra.mxu0 %v390
    %620 = vmatprep.subr.mxu0 %v388
    %621 = vmatpush1.msra.mxu0 %v387
    %622 = vmatprep.subr.mxu0 %v385
    %623 = vmatpush1.msra.mxu0 %v384
    %624 = vmatprep.subr.mxu0 %v382
    %625 = vmatpush1.msra.mxu0 %v381
    %626 = vmatprep.subr.mxu0 0.0
    %627 = vmatpush2.msra.mxu0 0.0
    %628 = vmatprep.subr.mxu0 0.0
    %629 = vmatpush2.msra.mxu0 0.0
    %630 = vmatprep.subr.mxu0 0.0
    %631 = vmatpush2.msra.mxu0 0.0
    %632 = vmatprep.subr.mxu0 0.0
    %633 = vmatpush2.msra.mxu0 0.0
    %634 = vmatprep.subr.mxu0 0.0
    %635 = vmatpush2.msra.mxu0 0.0
    %636 = vmatprep.subr.mxu0 0.0
    %637 = vmatpush2.msra.mxu0 0.0
    %638 = vmatprep.subr.mxu0 0.0
    %639 = vmatpush2.msra.mxu0 0.0
    %640 = vmatprep.subr.mxu0 0.0
    %641 = vmatpush2.msra.mxu0 0.0
    %642 = vmatprep.subr.mxu0 0.0
    %643 = vmatpush2.msra.mxu0 0.0
    %644 = vmatprep.subr.mxu0 0.0
    %645 = vmatpush2.msra.mxu0 0.0
    %646 = vmatprep.subr.mxu0 0.0
    %647 = vmatpush2.msra.mxu0 0.0
    %648 = vmatprep.subr.mxu0 0.0
    %649 = vmatpush2.msra.mxu0 0.0
    %650 = vmatprep.subr.mxu0 0.0
    %651 = vmatpush2.msra.mxu0 0.0
    %652 = vmatprep.subr.mxu0 0.0
    %653 = vmatpush2.msra.mxu0 0.0
    %654 = vmatprep.subr.mxu0 0.0
    %655 = vmatpush2.msra.mxu0 0.0
    %656 = vmatprep.subr.mxu0 0.0
    %657 = vmatpush2.msra.mxu0 0.0
    %658 = vmatprep.mubr.f32.mxu0 0.0
    %659 = vmatmul.mubr.f32.gmra.mxu0 %v587
    %v660 = vpop.f32.mrf.mxu0
    %v661 = vadd.f32 0.0, %v660
    %v662 = vpop.f32.mrf.mxu0
    %v663 = vadd.f32 0.0, %v662
    %664 = vdwg.mxu0
    %665 = vmatprep.subr.mxu0 0.0
    %666 = vmatpush1.msra.mxu0 %v428
    %667 = vmatprep.subr.mxu0 0.0
    %668 = vmatpush1.msra.mxu0 %v425
    %669 = vmatprep.subr.mxu0 0.0
    %670 = vmatpush1.msra.mxu0 %v422
    %671 = vmatprep.subr.mxu0 0.0
    %672 = vmatpush1.msra.mxu0 %v419
    %673 = vmatprep.subr.mxu0 0.0
    %674 = vmatpush1.msra.mxu0 %v416
    %675 = vmatprep.subr.mxu0 0.0
    %676 = vmatpush1.msra.mxu0 %v413
    %677 = vmatprep.subr.mxu0 0.0
    %678 = vmatpush1.msra.mxu0 %v410
    %679 = vmatprep.subr.mxu0 0.0
    %680 = vmatpush1.msra.mxu0 %v407
    %681 = vmatprep.subr.mxu0 0.0
    %682 = vmatpush1.msra.mxu0 %v404
    %683 = vmatprep.subr.mxu0 0.0
    %684 = vmatpush1.msra.mxu0 %v401
    %685 = vmatprep.subr.mxu0 0.0
    %686 = vmatpush1.msra.mxu0 %v398
    %687 = vmatprep.subr.mxu0 0.0
    %688 = vmatpush1.msra.mxu0 %v395
    %689 = vmatprep.subr.mxu0 0.0
    %690 = vmatpush1.msra.mxu0 %v392
    %691 = vmatprep.subr.mxu0 0.0
    %692 = vmatpush1.msra.mxu0 %v389
    %693 = vmatprep.subr.mxu0 0.0
    %694 = vmatpush1.msra.mxu0 %v386
    %695 = vmatprep.subr.mxu0 0.0
    %696 = vmatpush1.msra.mxu0 %v383
    %697 = vmatprep.subr.mxu0 0.0
    %698 = vmatpush2.msra.mxu0 0.0
    %699 = vmatprep.subr.mxu0 0.0
    %700 = vmatpush2.msra.mxu0 0.0
    %701 = vmatprep.subr.mxu0 0.0
    %702 = vmatpush2.msra.mxu0 0.0
    %703 = vmatprep.subr.mxu0 0.0
    %704 = vmatpush2.msra.mxu0 0.0
    %705 = vmatprep.subr.mxu0 0.0
    %706 = vmatpush2.msra.mxu0 0.0
    %707 = vmatprep.subr.mxu0 0.0
    %708 = vmatpush2.msra.mxu0 0.0
    %709 = vmatprep.subr.mxu0 0.0
    %710 = vmatpush2.msra.mxu0 0.0
    %711 = vmatprep.subr.mxu0 0.0
    %712 = vmatpush2.msra.mxu0 0.0
    %713 = vmatprep.subr.mxu0 0.0
    %714 = vmatpush2.msra.mxu0 0.0
    %715 = vmatprep.subr.mxu0 0.0
    %716 = vmatpush2.msra.mxu0 0.0
    %717 = vmatprep.subr.mxu0 0.0
    %718 = vmatpush2.msra.mxu0 0.0
    %719 = vmatprep.subr.mxu0 0.0
    %720 = vmatpush2.msra.mxu0 0.0
    %721 = vmatprep.subr.mxu0 0.0
    %722 = vmatpush2.msra.mxu0 0.0
    %723 = vmatprep.subr.mxu0 0.0
    %724 = vmatpush2.msra.mxu0 0.0
    %725 = vmatprep.subr.mxu0 0.0
    %726 = vmatpush2.msra.mxu0 0.0
    %727 = vmatprep.subr.mxu0 0.0
    %728 = vmatpush2.msra.mxu0 0.0
    %729 = vmatprep.mubr.f32.mxu0 0.0
    %730 = vmatmul.mubr.f32.gmra.mxu0 %v587
    %v731 = vpop.f32.mrf.mxu0
    %v732 = vadd.f32 0.0, %v731
    %v733 = vpop.f32.mrf.mxu0
    %734 = vdwg.mxu0
    %v735 = vadd.f32 %v591, %v661
    %v736 = vadd.f32 %v592, %v663
    %v737 = vmul.f32 %v735, 0.5
    %v738 = vmul.f32 %v736, 0.5
    %v739 = vtanh.pop %v737
    %v740 = vtanh.pop %v738
    %v741 = vadd.f32 %v739, 1.0
    %v742 = vadd.f32 %v740, 1.0
    %v743 = vmul.f32 %v741, 0.5
    %v744 = vmul.f32 %v742, 0.5
    %v745 = vadd.f32 %v732, %v373
    %v746 = vmul.f32 %v743, %v745
    %v747 = vadd.f32 %v593, %v746
    %v748 = vtanh.pop %v747
    %v749 = vsub.f32 1.0, %v744
    %v750 = vmul.f32 %v749, %v748
    %v751 = vmul.f32 %v744, %v587
    %v752 = vadd.f32 %v750, %v751
    %s753 = smul.u32 2, 3
    %s754 = smul.addr %s753, 8
    %s755 = scalar_lea.vmem [#allocation2], %s754
    %v756 = vld [vmem:[%s755] sm:$0xff]
    %v757 = vld [vmem:[%s755 + $0x8] sm:$0xff]
    %v758 = vld [vmem:[%s755 + $0x10] sm:$0xff]
    %759 = vmatprep.subr.mxu0 %v427
    %760 = vmatpush1.msra.mxu0 %v426
    %761 = vmatprep.subr.mxu0 %v424
    %762 = vmatpush1.msra.mxu0 %v423
    %763 = vmatprep.subr.mxu0 %v421
    %764 = vmatpush1.msra.mxu0 %v420
    %765 = vmatprep.subr.mxu0 %v418
    %766 = vmatpush1.msra.mxu0 %v417
    %767 = vmatprep.subr.mxu0 %v415
    %768 = vmatpush1.msra.mxu0 %v414
    %769 = vmatprep.subr.mxu0 %v412
    %770 = vmatpush1.msra.mxu0 %v411
    %771 = vmatprep.subr.mxu0 %v409
    %772 = vmatpush1.msra.mxu0 %v408
    %773 = vmatprep.subr.mxu0 %v406
    %774 = vmatpush1.msra.mxu0 %v405
    %775 = vmatprep.subr.mxu0 %v403
    %776 = vmatpush1.msra.mxu0 %v402
    %777 = vmatprep.subr.mxu0 %v400
    %778 = vmatpush1.msra.mxu0 %v399
    %779 = vmatprep.subr.mxu0 %v397
    %780 = vmatpush1.msra.mxu0 %v396
    %781 = vmatprep.subr.mxu0 %v394
    %782 = vmatpush1.msra.mxu0 %v393
    %783 = vmatprep.subr.mxu0 %v391
    %784 = vmatpush1.msra.mxu0 %v390
    %785 = vmatprep.subr.mxu0 %v388
    %786 = vmatpush1.msra.mxu0 %v387
    %787 = vmatprep.subr.mxu0 %v385
    %788 = vmatpush1.msra.mxu0 %v384
    %789 = vmatprep.subr.mxu0 %v382
    %790 = vmatpush1.msra.mxu0 %v381
    %791 = vmatprep.subr.mxu0 0.0
    %792 = vmatpush2.msra.mxu0 0.0
    %793 = vmatprep.subr.mxu0 0.0
    %794 = vmatpush2.msra.mxu0 0.0
    %795 = vmatprep.subr.mxu0 0.0
    %796 = vmatpush2.msra.mxu0 0.0
    %797 = vmatprep.subr.mxu0 0.0
    %798 = vmatpush2.msra.mxu0 0.0
    %799 = vmatprep.subr.mxu0 0.0
    %800 = vmatpush2.msra.mxu0 0.0
    %801 = vmatprep.subr.mxu0 0.0
    %802 = vmatpush2.msra.mxu0 0.0
    %803 = vmatprep.subr.mxu0 0.0
    %804 = vmatpush2.msra.mxu0 0.0
    %805 = vmatprep.subr.mxu0 0.0
    %806 = vmatpush2.msra.mxu0 0.0
    %807 = vmatprep.subr.mxu0 0.0
    %808 = vmatpush2.msra.mxu0 0.0
    %809 = vmatprep.subr.mxu0 0.0
    %810 = vmatpush2.msra.mxu0 0.0
    %811 = vmatprep.subr.mxu0 0.0
    %812 = vmatpush2.msra.mxu0 0.0
    %813 = vmatprep.subr.mxu0 0.0
    %814 = vmatpush2.msra.mxu0 0.0
    %815 = vmatprep.subr.mxu0 0.0
    %816 = vmatpush2.msra.mxu0 0.0
    %817 = vmatprep.subr.mxu0 0.0
    %818 = vmatpush2.msra.mxu0 0.0
    %819 = vmatprep.subr.mxu0 0.0
    %820 = vmatpush2.msra.mxu0 0.0
    %821 = vmatprep.subr.mxu0 0.0
    %822 = vmatpush2.msra.mxu0 0.0
    %823 = vmatprep.mubr.f32.mxu0 0.0
    %824 = vmatmul.mubr.f32.gmra.mxu0 %v752
    %v825 = vpop.f32.mrf.mxu0
    %v826 = vadd.f32 0.0, %v825
    %v827 = vpop.f32.mrf.mxu0
    %v828 = vadd.f32 0.0, %v827
    %829 = vdwg.mxu0
    %830 = vmatprep.subr.mxu0 0.0
    %831 = vmatpush1.msra.mxu0 %v428
    %832 = vmatprep.subr.mxu0 0.0
    %833 = vmatpush1.msra.mxu0 %v425
    %834 = vmatprep.subr.mxu0 0.0
    %835 = vmatpush1.msra.mxu0 %v422
    %836 = vmatprep.subr.mxu0 0.0
    %837 = vmatpush1.msra.mxu0 %v419
    %838 = vmatprep.subr.mxu0 0.0
    %839 = vmatpush1.msra.mxu0 %v416
    %840 = vmatprep.subr.mxu0 0.0
    %841 = vmatpush1.msra.mxu0 %v413
    %842 = vmatprep.subr.mxu0 0.0
    %843 = vmatpush1.msra.mxu0 %v410
    %844 = vmatprep.subr.mxu0 0.0
    %845 = vmatpush1.msra.mxu0 %v407
    %846 = vmatprep.subr.mxu0 0.0
    %847 = vmatpush1.msra.mxu0 %v404
    %848 = vmatprep.subr.mxu0 0.0
    %849 = vmatpush1.msra.mxu0 %v401
    %850 = vmatprep.subr.mxu0 0.0
    %851 = vmatpush1.msra.mxu0 %v398
    %852 = vmatprep.subr.mxu0 0.0
    %853 = vmatpush1.msra.mxu0 %v395
    %854 = vmatprep.subr.mxu0 0.0
    %855 = vmatpush1.msra.mxu0 %v392
    %856 = vmatprep.subr.mxu0 0.0
    %857 = vmatpush1.msra.mxu0 %v389
    %858 = vmatprep.subr.mxu0 0.0
    %859 = vmatpush1.msra.mxu0 %v386
    %860 = vmatprep.subr.mxu0 0.0
    %861 = vmatpush1.msra.mxu0 %v383
    %862 = vmatprep.subr.mxu0 0.0
    %863 = vmatpush2.msra.mxu0 0.0
    %864 = vmatprep.subr.mxu0 0.0
    %865 = vmatpush2.msra.mxu0 0.0
    %866 = vmatprep.subr.mxu0 0.0
    %867 = vmatpush2.msra.mxu0 0.0
    %868 = vmatprep.subr.mxu0 0.0
    %869 = vmatpush2.msra.mxu0 0.0
    %870 = vmatprep.subr.mxu0 0.0
    %871 = vmatpush2.msra.mxu0 0.0
    %872 = vmatprep.subr.mxu0 0.0
    %873 = vmatpush2.msra.mxu0 0.0
    %874 = vmatprep.subr.mxu0 0.0
    %875 = vmatpush2.msra.mxu0 0.0
    %876 = vmatprep.subr.mxu0 0.0
    %877 = vmatpush2.msra.mxu0 0.0
    %878 = vmatprep.subr.mxu0 0.0
    %879 = vmatpush2.msra.mxu0 0.0
    %880 = vmatprep.subr.mxu0 0.0
    %881 = vmatpush2.msra.mxu0 0.0
    %882 = vmatprep.subr.mxu0 0.0
    %883 = vmatpush2.msra.mxu0 0.0
    %884 = vmatprep.subr.mxu0 0.0
    %885 = vmatpush2.msra.mxu0 0.0
    %886 = vmatprep.subr.mxu0 0.0
    %887 = vmatpush2.msra.mxu0 0.0
    %888 = vmatprep.subr.mxu0 0.0
    %889 = vmatpush2.msra.mxu0 0.0
    %890 = vmatprep.subr.mxu0 0.0
    %891 = vmatpush2.msra.mxu0 0.0
    %892 = vmatprep.subr.mxu0 0.0
    %893 = vmatpush2.msra.mxu0 0.0
    %894 = vmatprep.mubr.f32.mxu0 0.0
    %895 = vmatmul.mubr.f32.gmra.mxu0 %v752
    %v896 = vpop.f32.mrf.mxu0
    %v897 = vadd.f32 0.0, %v896
    %v898 = vpop.f32.mrf.mxu0
    %899 = vdwg.mxu0
    %v900 = vadd.f32 %v756, %v826
    %v901 = vadd.f32 %v757, %v828
    %v902 = vmul.f32 %v900, 0.5
    %v903 = vmul.f32 %v901, 0.5
    %v904 = vtanh.pop %v902
    %v905 = vtanh.pop %v903
    %v906 = vadd.f32 %v904, 1.0
    %v907 = vadd.f32 %v905, 1.0
    %v908 = vmul.f32 %v906, 0.5
    %v909 = vmul.f32 %v907, 0.5
    %v910 = vadd.f32 %v897, %v373
    %v911 = vmul.f32 %v908, %v910
    %v912 = vadd.f32 %v758, %v911
    %v913 = vtanh.pop %v912
    %v914 = vsub.f32 1.0, %v909
    %v915 = vmul.f32 %v914, %v913
    %v916 = vmul.f32 %v909, %v752
    %v917 = vadd.f32 %v915, %v916
    %s918 = smul.u32 3, 3
    %s919 = smul.addr %s918, 8
    %s920 = scalar_lea.vmem [#allocation2], %s919
    %v921 = vld [vmem:[%s920] sm:$0xff]
    %v922 = vld [vmem:[%s920 + $0x8] sm:$0xff]
    %v923 = vld [vmem:[%s920 + $0x10] sm:$0xff]
    %924 = vmatprep.subr.mxu0 %v427
    %925 = vmatpush1.msra.mxu0 %v426
    %926 = vmatprep.subr.mxu0 %v424
    %927 = vmatpush1.msra.mxu0 %v423
    %928 = vmatprep.subr.mxu0 %v421
    %929 = vmatpush1.msra.mxu0 %v420
    %930 = vmatprep.subr.mxu0 %v418
    %931 = vmatpush1.msra.mxu0 %v417
    %932 = vmatprep.subr.mxu0 %v415
    %933 = vmatpush1.msra.mxu0 %v414
    %934 = vmatprep.subr.mxu0 %v412
    %935 = vmatpush1.msra.mxu0 %v411
    %936 = vmatprep.subr.mxu0 %v409
    %937 = vmatpush1.msra.mxu0 %v408
    %938 = vmatprep.subr.mxu0 %v406
    %939 = vmatpush1.msra.mxu0 %v405
    %940 = vmatprep.subr.mxu0 %v403
    %941 = vmatpush1.msra.mxu0 %v402
    %942 = vmatprep.subr.mxu0 %v400
    %943 = vmatpush1.msra.mxu0 %v399
    %944 = vmatprep.subr.mxu0 %v397
    %945 = vmatpush1.msra.mxu0 %v396
    %946 = vmatprep.subr.mxu0 %v394
    %947 = vmatpush1.msra.mxu0 %v393
    %948 = vmatprep.subr.mxu0 %v391
    %949 = vmatpush1.msra.mxu0 %v390
    %950 = vmatprep.subr.mxu0 %v388
    %951 = vmatpush1.msra.mxu0 %v387
    %952 = vmatprep.subr.mxu0 %v385
    %953 = vmatpush1.msra.mxu0 %v384
    %954 = vmatprep.subr.mxu0 %v382
    %955 = vmatpush1.msra.mxu0 %v381
    %956 = vmatprep.subr.mxu0 0.0
    %957 = vmatpush2.msra.mxu0 0.0
    %958 = vmatprep.subr.mxu0 0.0
    %959 = vmatpush2.msra.mxu0 0.0
    %960 = vmatprep.subr.mxu0 0.0
    %961 = vmatpush2.msra.mxu0 0.0
    %962 = vmatprep.subr.mxu0 0.0
    %963 = vmatpush2.msra.mxu0 0.0
    %964 = vmatprep.subr.mxu0 0.0
    %965 = vmatpush2.msra.mxu0 0.0
    %966 = vmatprep.subr.mxu0 0.0
    %967 = vmatpush2.msra.mxu0 0.0
    %968 = vmatprep.subr.mxu0 0.0
    %969 = vmatpush2.msra.mxu0 0.0
    %970 = vmatprep.subr.mxu0 0.0
    %971 = vmatpush2.msra.mxu0 0.0
    %972 = vmatprep.subr.mxu0 0.0
    %973 = vmatpush2.msra.mxu0 0.0
    %974 = vmatprep.subr.mxu0 0.0
    %975 = vmatpush2.msra.mxu0 0.0
    %976 = vmatprep.subr.mxu0 0.0
    %977 = vmatpush2.msra.mxu0 0.0
    %978 = vmatprep.subr.mxu0 0.0
    %979 = vmatpush2.msra.mxu0 0.0
    %980 = vmatprep.subr.mxu0 0.0
    %981 = vmatpush2.msra.mxu0 0.0
    %982 = vmatprep.subr.mxu0 0.0
    %983 = vmatpush2.msra.mxu0 0.0
    %984 = vmatprep.subr.mxu0 0.0
    %985 = vmatpush2.msra.mxu0 0.0
    %986 = vmatprep.subr.mxu0 0.0
    %987 = vmatpush2.msra.mxu0 0.0
    %988 = vmatprep.mubr.f32.mxu0 0.0
    %989 = vmatmul.mubr.f32.gmra.mxu0 %v917
    %v990 = vpop.f32.mrf.mxu0
    %v991 = vadd.f32 0.0, %v990
    %v992 = vpop.f32.mrf.mxu0
    %v993 = vadd.f32 0.0, %v992
    %994 = vdwg.mxu0
    %995 = vmatprep.subr.mxu0 0.0
    %996 = vmatpush1.msra.mxu0 %v428
    %997 = vmatprep.subr.mxu0 0.0
    %998 = vmatpush1.msra.mxu0 %v425
    %999 = vmatprep.subr.mxu0 0.0
    %1000 = vmatpush1.msra.mxu0 %v422
    %1001 = vmatprep.subr.mxu0 0.0
    %1002 = vmatpush1.msra.mxu0 %v419
    %1003 = vmatprep.subr.mxu0 0.0
    %1004 = vmatpush1.msra.mxu0 %v416
    %1005 = vmatprep.subr.mxu0 0.0
    %1006 = vmatpush1.msra.mxu0 %v413
    %1007 = vmatprep.subr.mxu0 0.0
    %1008 = vmatpush1.msra.mxu0 %v410
    %1009 = vmatprep.subr.mxu0 0.0
    %1010 = vmatpush1.msra.mxu0 %v407
    %1011 = vmatprep.subr.mxu0 0.0
    %1012 = vmatpush1.msra.mxu0 %v404
    %1013 = vmatprep.subr.mxu0 0.0
    %1014 = vmatpush1.msra.mxu0 %v401
    %1015 = vmatprep.subr.mxu0 0.0
    %1016 = vmatpush1.msra.mxu0 %v398
    %1017 = vmatprep.subr.mxu0 0.0
    %1018 = vmatpush1.msra.mxu0 %v395
    %1019 = vmatprep.subr.mxu0 0.0
    %1020 = vmatpush1.msra.mxu0 %v392
    %1021 = vmatprep.subr.mxu0 0.0
    %1022 = vmatpush1.msra.mxu0 %v389
    %1023 = vmatprep.subr.mxu0 0.0
    %1024 = vmatpush1.msra.mxu0 %v386
    %1025 = vmatprep.subr.mxu0 0.0
    %1026 = vmatpush1.msra.mxu0 %v383
    %1027 = vmatprep.subr.mxu0 0.0
    %1028 = vmatpush2.msra.mxu0 0.0
    %1029 = vmatprep.subr.mxu0 0.0
    %1030 = vmatpush2.msra.mxu0 0.0
    %1031 = vmatprep.subr.mxu0 0.0
    %1032 = vmatpush2.msra.mxu0 0.0
    %1033 = vmatprep.subr.mxu0 0.0
    %1034 = vmatpush2.msra.mxu0 0.0
    %1035 = vmatprep.subr.mxu0 0.0
    %1036 = vmatpush2.msra.mxu0 0.0
    %1037 = vmatprep.subr.mxu0 0.0
    %1038 = vmatpush2.msra.mxu0 0.0
    %1039 = vmatprep.subr.mxu0 0.0
    %1040 = vmatpush2.msra.mxu0 0.0
    %1041 = vmatprep.subr.mxu0 0.0
    %1042 = vmatpush2.msra.mxu0 0.0
    %1043 = vmatprep.subr.mxu0 0.0
    %1044 = vmatpush2.msra.mxu0 0.0
    %1045 = vmatprep.subr.mxu0 0.0
    %1046 = vmatpush2.msra.mxu0 0.0
    %1047 = vmatprep.subr.mxu0 0.0
    %1048 = vmatpush2.msra.mxu0 0.0
    %1049 = vmatprep.subr.mxu0 0.0
    %1050 = vmatpush2.msra.mxu0 0.0
    %1051 = vmatprep.subr.mxu0 0.0
    %1052 = vmatpush2.msra.mxu0 0.0
    %1053 = vmatprep.subr.mxu0 0.0
    %1054 = vmatpush2.msra.mxu0 0.0
    %1055 = vmatprep.subr.mxu0 0.0
    %1056 = vmatpush2.msra.mxu0 0.0
    %1057 = vmatprep.subr.mxu0 0.0
    %1058 = vmatpush2.msra.mxu0 0.0
    %1059 = vmatprep.mubr.f32.mxu0 0.0
    %1060 = vmatmul.mubr.f32.gmra.mxu0 %v917
    %v1061 = vpop.f32.mrf.mxu0
    %v1062 = vadd.f32 0.0, %v1061
    %v1063 = vpop.f32.mrf.mxu0
    %1064 = vdwg.mxu0
    %v1065 = vadd.f32 %v921, %v991
    %v1066 = vadd.f32 %v922, %v993
    %v1067 = vmul.f32 %v1065, 0.5
    %v1068 = vmul.f32 %v1066, 0.5
    %v1069 = vtanh.pop %v1067
    %v1070 = vtanh.pop %v1068
    %v1071 = vadd.f32 %v1069, 1.0
    %v1072 = vadd.f32 %v1070, 1.0
    %v1073 = vmul.f32 %v1071, 0.5
    %v1074 = vmul.f32 %v1072, 0.5
    %v1075 = vadd.f32 %v1062, %v373
    %v1076 = vmul.f32 %v1073, %v1075
    %v1077 = vadd.f32 %v923, %v1076
    %v1078 = vtanh.pop %v1077
    %v1079 = vsub.f32 1.0, %v1074
    %v1080 = vmul.f32 %v1079, %v1078
    %v1081 = vmul.f32 %v1074, %v917
    %v1082 = vadd.f32 %v1080, %v1081
    %s1083 = smul.u32 4, 3
    %s1084 = smul.addr %s1083, 8
    %s1085 = scalar_lea.vmem [#allocation2], %s1084
    %v1086 = vld [vmem:[%s1085] sm:$0xff]
    %v1087 = vld [vmem:[%s1085 + $0x8] sm:$0xff]
    %v1088 = vld [vmem:[%s1085 + $0x10] sm:$0xff]
    %1089 = vmatprep.subr.mxu0 %v427
    %1090 = vmatpush1.msra.mxu0 %v426
    %1091 = vmatprep.subr.mxu0 %v424
    %1092 = vmatpush1.msra.mxu0 %v423
    %1093 = vmatprep.subr.mxu0 %v421
    %1094 = vmatpush1.msra.mxu0 %v420
    %1095 = vmatprep.subr.mxu0 %v418
    %1096 = vmatpush1.msra.mxu0 %v417
    %1097 = vmatprep.subr.mxu0 %v415
    %1098 = vmatpush1.msra.mxu0 %v414
    %1099 = vmatprep.subr.mxu0 %v412
    %1100 = vmatpush1.msra.mxu0 %v411
    %1101 = vmatprep.subr.mxu0 %v409
    %1102 = vmatpush1.msra.mxu0 %v408
    %1103 = vmatprep.subr.mxu0 %v406
    %1104 = vmatpush1.msra.mxu0 %v405
    %1105 = vmatprep.subr.mxu0 %v403
    %1106 = vmatpush1.msra.mxu0 %v402
    %1107 = vmatprep.subr.mxu0 %v400
    %1108 = vmatpush1.msra.mxu0 %v399
    %1109 = vmatprep.subr.mxu0 %v397
    %1110 = vmatpush1.msra.mxu0 %v396
    %1111 = vmatprep.subr.mxu0 %v394
    %1112 = vmatpush1.msra.mxu0 %v393
    %1113 = vmatprep.subr.mxu0 %v391
    %1114 = vmatpush1.msra.mxu0 %v390
    %1115 = vmatprep.subr.mxu0 %v388
    %1116 = vmatpush1.msra.mxu0 %v387
    %1117 = vmatprep.subr.mxu0 %v385
    %1118 = vmatpush1.msra.mxu0 %v384
    %1119 = vmatprep.subr.mxu0 %v382
    %1120 = vmatpush1.msra.mxu0 %v381
    %1121 = vmatprep.subr.mxu0 0.0
    %1122 = vmatpush2.msra.mxu0 0.0
    %1123 = vmatprep.subr.mxu0 0.0
    %1124 = vmatpush2.msra.mxu0 0.0
    %1125 = vmatprep.subr.mxu0 0.0
    %1126 = vmatpush2.msra.mxu0 0.0
    %1127 = vmatprep.subr.mxu0 0.0
    %1128 = vmatpush2.msra.mxu0 0.0
    %1129 = vmatprep.subr.mxu0 0.0
    %1130 = vmatpush2.msra.mxu0 0.0
    %1131 = vmatprep.subr.mxu0 0.0
    %1132 = vmatpush2.msra.mxu0 0.0
    %1133 = vmatprep.subr.mxu0 0.0
    %1134 = vmatpush2.msra.mxu0 0.0
    %1135 = vmatprep.subr.mxu0 0.0
    %1136 = vmatpush2.msra.mxu0 0.0
    %1137 = vmatprep.subr.mxu0 0.0
    %1138 = vmatpush2.msra.mxu0 0.0
    %1139 = vmatprep.subr.mxu0 0.0
    %1140 = vmatpush2.msra.mxu0 0.0
    %1141 = vmatprep.subr.mxu0 0.0
    %1142 = vmatpush2.msra.mxu0 0.0
    %1143 = vmatprep.subr.mxu0 0.0
    %1144 = vmatpush2.msra.mxu0 0.0
    %1145 = vmatprep.subr.mxu0 0.0
    %1146 = vmatpush2.msra.mxu0 0.0
    %1147 = vmatprep.subr.mxu0 0.0
    %1148 = vmatpush2.msra.mxu0 0.0
    %1149 = vmatprep.subr.mxu0 0.0
    %1150 = vmatpush2.msra.mxu0 0.0
    %1151 = vmatprep.subr.mxu0 0.0
    %1152 = vmatpush2.msra.mxu0 0.0
    %1153 = vmatprep.mubr.f32.mxu0 0.0
    %1154 = vmatmul.mubr.f32.gmra.mxu0 %v1082
    %v1155 = vpop.f32.mrf.mxu0
    %v1156 = vadd.f32 0.0, %v1155
    %v1157 = vpop.f32.mrf.mxu0
    %v1158 = vadd.f32 0.0, %v1157
    %1159 = vdwg.mxu0
    %1160 = vmatprep.subr.mxu0 0.0
    %1161 = vmatpush1.msra.mxu0 %v428
    %1162 = vmatprep.subr.mxu0 0.0
    %1163 = vmatpush1.msra.mxu0 %v425
    %1164 = vmatprep.subr.mxu0 0.0
    %1165 = vmatpush1.msra.mxu0 %v422
    %1166 = vmatprep.subr.mxu0 0.0
    %1167 = vmatpush1.msra.mxu0 %v419
    %1168 = vmatprep.subr.mxu0 0.0
    %1169 = vmatpush1.msra.mxu0 %v416
    %1170 = vmatprep.subr.mxu0 0.0
    %1171 = vmatpush1.msra.mxu0 %v413
    %1172 = vmatprep.subr.mxu0 0.0
    %1173 = vmatpush1.msra.mxu0 %v410
    %1174 = vmatprep.subr.mxu0 0.0
    %1175 = vmatpush1.msra.mxu0 %v407
    %1176 = vmatprep.subr.mxu0 0.0
    %1177 = vmatpush1.msra.mxu0 %v404
    %1178 = vmatprep.subr.mxu0 0.0
    %1179 = vmatpush1.msra.mxu0 %v401
    %1180 = vmatprep.subr.mxu0 0.0
    %1181 = vmatpush1.msra.mxu0 %v398
    %1182 = vmatprep.subr.mxu0 0.0
    %1183 = vmatpush1.msra.mxu0 %v395
    %1184 = vmatprep.subr.mxu0 0.0
    %1185 = vmatpush1.msra.mxu0 %v392
    %1186 = vmatprep.subr.mxu0 0.0
    %1187 = vmatpush1.msra.mxu0 %v389
    %1188 = vmatprep.subr.mxu0 0.0
    %1189 = vmatpush1.msra.mxu0 %v386
    %1190 = vmatprep.subr.mxu0 0.0
    %1191 = vmatpush1.msra.mxu0 %v383
    %1192 = vmatprep.subr.mxu0 0.0
    %1193 = vmatpush2.msra.mxu0 0.0
    %1194 = vmatprep.subr.mxu0 0.0
    %1195 = vmatpush2.msra.mxu0 0.0
    %1196 = vmatprep.subr.mxu0 0.0
    %1197 = vmatpush2.msra.mxu0 0.0
    %1198 = vmatprep.subr.mxu0 0.0
    %1199 = vmatpush2.msra.mxu0 0.0
    %1200 = vmatprep.subr.mxu0 0.0
    %1201 = vmatpush2.msra.mxu0 0.0
    %1202 = vmatprep.subr.mxu0 0.0
    %1203 = vmatpush2.msra.mxu0 0.0
    %1204 = vmatprep.subr.mxu0 0.0
    %1205 = vmatpush2.msra.mxu0 0.0
    %1206 = vmatprep.subr.mxu0 0.0
    %1207 = vmatpush2.msra.mxu0 0.0
    %1208 = vmatprep.subr.mxu0 0.0
    %1209 = vmatpush2.msra.mxu0 0.0
    %1210 = vmatprep.subr.mxu0 0.0
    %1211 = vmatpush2.msra.mxu0 0.0
    %1212 = vmatprep.subr.mxu0 0.0
    %1213 = vmatpush2.msra.mxu0 0.0
    %1214 = vmatprep.subr.mxu0 0.0
    %1215 = vmatpush2.msra.mxu0 0.0
    %1216 = vmatprep.subr.mxu0 0.0
    %1217 = vmatpush2.msra.mxu0 0.0
    %1218 = vmatprep.subr.mxu0 0.0
    %1219 = vmatpush2.msra.mxu0 0.0
    %1220 = vmatprep.subr.mxu0 0.0
    %1221 = vmatpush2.msra.mxu0 0.0
    %1222 = vmatprep.subr.mxu0 0.0
    %1223 = vmatpush2.msra.mxu0 0.0
    %1224 = vmatprep.mubr.f32.mxu0 0.0
    %1225 = vmatmul.mubr.f32.gmra.mxu0 %v1082
    %v1226 = vpop.f32.mrf.mxu0
    %v1227 = vadd.f32 0.0, %v1226
    %v1228 = vpop.f32.mrf.mxu0
    %1229 = vdwg.mxu0
    %v1230 = vadd.f32 %v1086, %v1156
    %v1231 = vadd.f32 %v1087, %v1158
    %v1232 = vmul.f32 %v1230, 0.5
    %v1233 = vmul.f32 %v1231, 0.5
    %v1234 = vtanh.pop %v1232
    %v1235 = vtanh.pop %v1233
    %v1236 = vadd.f32 %v1234, 1.0
    %v1237 = vadd.f32 %v1235, 1.0
    %v1238 = vmul.f32 %v1236, 0.5
    %v1239 = vmul.f32 %v1237, 0.5
    %v1240 = vadd.f32 %v1227, %v373
    %v1241 = vmul.f32 %v1238, %v1240
    %v1242 = vadd.f32 %v1088, %v1241
    %v1243 = vtanh.pop %v1242
    %v1244 = vsub.f32 1.0, %v1239
    %v1245 = vmul.f32 %v1244, %v1243
    %v1246 = vmul.f32 %v1239, %v1082
    %v1247 = vadd.f32 %v1245, %v1246
    %s1248 = smul.u32 5, 3
    %s1249 = smul.addr %s1248, 8
    %s1250 = scalar_lea.vmem [#allocation2], %s1249
    %v1251 = vld [vmem:[%s1250] sm:$0xff]
    %v1252 = vld [vmem:[%s1250 + $0x8] sm:$0xff]
    %v1253 = vld [vmem:[%s1250 + $0x10] sm:$0xff]
    %1254 = vmatprep.subr.mxu0 %v427
    %1255 = vmatpush1.msra.mxu0 %v426
    %1256 = vmatprep.subr.mxu0 %v424
    %1257 = vmatpush1.msra.mxu0 %v423
    %1258 = vmatprep.subr.mxu0 %v421
    %1259 = vmatpush1.msra.mxu0 %v420
    %1260 = vmatprep.subr.mxu0 %v418
    %1261 = vmatpush1.msra.mxu0 %v417
    %1262 = vmatprep.subr.mxu0 %v415
    %1263 = vmatpush1.msra.mxu0 %v414
    %1264 = vmatprep.subr.mxu0 %v412
    %1265 = vmatpush1.msra.mxu0 %v411
    %1266 = vmatprep.subr.mxu0 %v409
    %1267 = vmatpush1.msra.mxu0 %v408
    %1268 = vmatprep.subr.mxu0 %v406
    %1269 = vmatpush1.msra.mxu0 %v405
    %1270 = vmatprep.subr.mxu0 %v403
    %1271 = vmatpush1.msra.mxu0 %v402
    %1272 = vmatprep.subr.mxu0 %v400
    %1273 = vmatpush1.msra.mxu0 %v399
    %1274 = vmatprep.subr.mxu0 %v397
    %1275 = vmatpush1.msra.mxu0 %v396
    %1276 = vmatprep.subr.mxu0 %v394
    %1277 = vmatpush1.msra.mxu0 %v393
    %1278 = vmatprep.subr.mxu0 %v391
    %1279 = vmatpush1.msra.mxu0 %v390
    %1280 = vmatprep.subr.mxu0 %v388
    %1281 = vmatpush1.msra.mxu0 %v387
    %1282 = vmatprep.subr.mxu0 %v385
    %1283 = vmatpush1.msra.mxu0 %v384
    %1284 = vmatprep.subr.mxu0 %v382
    %1285 = vmatpush1.msra.mxu0 %v381
    %1286 = vmatprep.subr.mxu0 0.0
    %1287 = vmatpush2.msra.mxu0 0.0
    %1288 = vmatprep.subr.mxu0 0.0
    %1289 = vmatpush2.msra.mxu0 0.0
    %1290 = vmatprep.subr.mxu0 0.0
    %1291 = vmatpush2.msra.mxu0 0.0
    %1292 = vmatprep.subr.mxu0 0.0
    %1293 = vmatpush2.msra.mxu0 0.0
    %1294 = vmatprep.subr.mxu0 0.0
    %1295 = vmatpush2.msra.mxu0 0.0
    %1296 = vmatprep.subr.mxu0 0.0
    %1297 = vmatpush2.msra.mxu0 0.0
    %1298 = vmatprep.subr.mxu0 0.0
    %1299 = vmatpush2.msra.mxu0 0.0
    %1300 = vmatprep.subr.mxu0 0.0
    %1301 = vmatpush2.msra.mxu0 0.0
    %1302 = vmatprep.subr.mxu0 0.0
    %1303 = vmatpush2.msra.mxu0 0.0
    %1304 = vmatprep.subr.mxu0 0.0
    %1305 = vmatpush2.msra.mxu0 0.0
    %1306 = vmatprep.subr.mxu0 0.0
    %1307 = vmatpush2.msra.mxu0 0.0
    %1308 = vmatprep.subr.mxu0 0.0
    %1309 = vmatpush2.msra.mxu0 0.0
    %1310 = vmatprep.subr.mxu0 0.0
    %1311 = vmatpush2.msra.mxu0 0.0
    %1312 = vmatprep.subr.mxu0 0.0
    %1313 = vmatpush2.msra.mxu0 0.0
    %1314 = vmatprep.subr.mxu0 0.0
    %1315 = vmatpush2.msra.mxu0 0.0
    %1316 = vmatprep.subr.mxu0 0.0
    %1317 = vmatpush2.msra.mxu0 0.0
    %1318 = vmatprep.mubr.f32.mxu0 0.0
    %1319 = vmatmul.mubr.f32.gmra.mxu0 %v1247
    %v1320 = vpop.f32.mrf.mxu0
    %v1321 = vadd.f32 0.0, %v1320
    %v1322 = vpop.f32.mrf.mxu0
    %v1323 = vadd.f32 0.0, %v1322
    %1324 = vdwg.mxu0
    %1325 = vmatprep.subr.mxu0 0.0
    %1326 = vmatpush1.msra.mxu0 %v428
    %1327 = vmatprep.subr.mxu0 0.0
    %1328 = vmatpush1.msra.mxu0 %v425
    %1329 = vmatprep.subr.mxu0 0.0
    %1330 = vmatpush1.msra.mxu0 %v422
    %1331 = vmatprep.subr.mxu0 0.0
    %1332 = vmatpush1.msra.mxu0 %v419
    %1333 = vmatprep.subr.mxu0 0.0
    %1334 = vmatpush1.msra.mxu0 %v416
    %1335 = vmatprep.subr.mxu0 0.0
    %1336 = vmatpush1.msra.mxu0 %v413
    %1337 = vmatprep.subr.mxu0 0.0
    %1338 = vmatpush1.msra.mxu0 %v410
    %1339 = vmatprep.subr.mxu0 0.0
    %1340 = vmatpush1.msra.mxu0 %v407
    %1341 = vmatprep.subr.mxu0 0.0
    %1342 = vmatpush1.msra.mxu0 %v404
    %1343 = vmatprep.subr.mxu0 0.0
    %1344 = vmatpush1.msra.mxu0 %v401
    %1345 = vmatprep.subr.mxu0 0.0
    %1346 = vmatpush1.msra.mxu0 %v398
    %1347 = vmatprep.subr.mxu0 0.0
    %1348 = vmatpush1.msra.mxu0 %v395
    %1349 = vmatprep.subr.mxu0 0.0
    %1350 = vmatpush1.msra.mxu0 %v392
    %1351 = vmatprep.subr.mxu0 0.0
    %1352 = vmatpush1.msra.mxu0 %v389
    %1353 = vmatprep.subr.mxu0 0.0
    %1354 = vmatpush1.msra.mxu0 %v386
    %1355 = vmatprep.subr.mxu0 0.0
    %1356 = vmatpush1.msra.mxu0 %v383
    %1357 = vmatprep.subr.mxu0 0.0
    %1358 = vmatpush2.msra.mxu0 0.0
    %1359 = vmatprep.subr.mxu0 0.0
    %1360 = vmatpush2.msra.mxu0 0.0
    %1361 = vmatprep.subr.mxu0 0.0
    %1362 = vmatpush2.msra.mxu0 0.0
    %1363 = vmatprep.subr.mxu0 0.0
    %1364 = vmatpush2.msra.mxu0 0.0
    %1365 = vmatprep.subr.mxu0 0.0
    %1366 = vmatpush2.msra.mxu0 0.0
    %1367 = vmatprep.subr.mxu0 0.0
    %1368 = vmatpush2.msra.mxu0 0.0
    %1369 = vmatprep.subr.mxu0 0.0
    %1370 = vmatpush2.msra.mxu0 0.0
    %1371 = vmatprep.subr.mxu0 0.0
    %1372 = vmatpush2.msra.mxu0 0.0
    %1373 = vmatprep.subr.mxu0 0.0
    %1374 = vmatpush2.msra.mxu0 0.0
    %1375 = vmatprep.subr.mxu0 0.0
    %1376 = vmatpush2.msra.mxu0 0.0
    %1377 = vmatprep.subr.mxu0 0.0
    %1378 = vmatpush2.msra.mxu0 0.0
    %1379 = vmatprep.subr.mxu0 0.0
    %1380 = vmatpush2.msra.mxu0 0.0
    %1381 = vmatprep.subr.mxu0 0.0
    %1382 = vmatpush2.msra.mxu0 0.0
    %1383 = vmatprep.subr.mxu0 0.0
    %1384 = vmatpush2.msra.mxu0 0.0
    %1385 = vmatprep.subr.mxu0 0.0
    %1386 = vmatpush2.msra.mxu0 0.0
    %1387 = vmatprep.subr.mxu0 0.0
    %1388 = vmatpush2.msra.mxu0 0.0
    %1389 = vmatprep.mubr.f32.mxu0 0.0
    %1390 = vmatmul.mubr.f32.gmra.mxu0 %v1247
    %v1391 = vpop.f32.mrf.mxu0
    %v1392 = vadd.f32 0.0, %v1391
    %v1393 = vpop.f32.mrf.mxu0
    %1394 = vdwg.mxu0
    %v1395 = vadd.f32 %v1251, %v1321
    %v1396 = vadd.f32 %v1252, %v1323
    %v1397 = vmul.f32 %v1395, 0.5
    %v1398 = vmul.f32 %v1396, 0.5
    %v1399 = vtanh.pop %v1397
    %v1400 = vtanh.pop %v1398
    %v1401 = vadd.f32 %v1399, 1.0
    %v1402 = vadd.f32 %v1400, 1.0
    %v1403 = vmul.f32 %v1401, 0.5
    %v1404 = vmul.f32 %v1402, 0.5
    %v1405 = vadd.f32 %v1392, %v373
    %v1406 = vmul.f32 %v1403, %v1405
    %v1407 = vadd.f32 %v1253, %v1406
    %v1408 = vtanh.pop %v1407
    %v1409 = vsub.f32 1.0, %v1404
    %v1410 = vmul.f32 %v1409, %v1408
    %v1411 = vmul.f32 %v1404, %v1247
    %v1412 = vadd.f32 %v1410, %v1411
    %s1413 = smul.u32 6, 3
    %s1414 = smul.addr %s1413, 8
    %s1415 = scalar_lea.vmem [#allocation2], %s1414
    %v1416 = vld [vmem:[%s1415] sm:$0xff]
    %v1417 = vld [vmem:[%s1415 + $0x8] sm:$0xff]
    %v1418 = vld [vmem:[%s1415 + $0x10] sm:$0xff]
    %1419 = vmatprep.subr.mxu0 %v427
    %1420 = vmatpush1.msra.mxu0 %v426
    %1421 = vmatprep.subr.mxu0 %v424
    %1422 = vmatpush1.msra.mxu0 %v423
    %1423 = vmatprep.subr.mxu0 %v421
    %1424 = vmatpush1.msra.mxu0 %v420
    %1425 = vmatprep.subr.mxu0 %v418
    %1426 = vmatpush1.msra.mxu0 %v417
    %1427 = vmatprep.subr.mxu0 %v415
    %1428 = vmatpush1.msra.mxu0 %v414
    %1429 = vmatprep.subr.mxu0 %v412
    %1430 = vmatpush1.msra.mxu0 %v411
    %1431 = vmatprep.subr.mxu0 %v409
    %1432 = vmatpush1.msra.mxu0 %v408
    %1433 = vmatprep.subr.mxu0 %v406
    %1434 = vmatpush1.msra.mxu0 %v405
    %1435 = vmatprep.subr.mxu0 %v403
    %1436 = vmatpush1.msra.mxu0 %v402
    %1437 = vmatprep.subr.mxu0 %v400
    %1438 = vmatpush1.msra.mxu0 %v399
    %1439 = vmatprep.subr.mxu0 %v397
    %1440 = vmatpush1.msra.mxu0 %v396
    %1441 = vmatprep.subr.mxu0 %v394
    %1442 = vmatpush1.msra.mxu0 %v393
    %1443 = vmatprep.subr.mxu0 %v391
    %1444 = vmatpush1.msra.mxu0 %v390
    %1445 = vmatprep.subr.mxu0 %v388
    %1446 = vmatpush1.msra.mxu0 %v387
    %1447 = vmatprep.subr.mxu0 %v385
    %1448 = vmatpush1.msra.mxu0 %v384
    %1449 = vmatprep.subr.mxu0 %v382
    %1450 = vmatpush1.msra.mxu0 %v381
    %1451 = vmatprep.subr.mxu0 0.0
    %1452 = vmatpush2.msra.mxu0 0.0
    %1453 = vmatprep.subr.mxu0 0.0
    %1454 = vmatpush2.msra.mxu0 0.0
    %1455 = vmatprep.subr.mxu0 0.0
    %1456 = vmatpush2.msra.mxu0 0.0
    %1457 = vmatprep.subr.mxu0 0.0
    %1458 = vmatpush2.msra.mxu0 0.0
    %1459 = vmatprep.subr.mxu0 0.0
    %1460 = vmatpush2.msra.mxu0 0.0
    %1461 = vmatprep.subr.mxu0 0.0
    %1462 = vmatpush2.msra.mxu0 0.0
    %1463 = vmatprep.subr.mxu0 0.0
    %1464 = vmatpush2.msra.mxu0 0.0
    %1465 = vmatprep.subr.mxu0 0.0
    %1466 = vmatpush2.msra.mxu0 0.0
    %1467 = vmatprep.subr.mxu0 0.0
    %1468 = vmatpush2.msra.mxu0 0.0
    %1469 = vmatprep.subr.mxu0 0.0
    %1470 = vmatpush2.msra.mxu0 0.0
    %1471 = vmatprep.subr.mxu0 0.0
    %1472 = vmatpush2.msra.mxu0 0.0
    %1473 = vmatprep.subr.mxu0 0.0
    %1474 = vmatpush2.msra.mxu0 0.0
    %1475 = vmatprep.subr.mxu0 0.0
    %1476 = vmatpush2.msra.mxu0 0.0
    %1477 = vmatprep.subr.mxu0 0.0
    %1478 = vmatpush2.msra.mxu0 0.0
    %1479 = vmatprep.subr.mxu0 0.0
    %1480 = vmatpush2.msra.mxu0 0.0
    %1481 = vmatprep.subr.mxu0 0.0
    %1482 = vmatpush2.msra.mxu0 0.0
    %1483 = vmatprep.mubr.f32.mxu0 0.0
    %1484 = vmatmul.mubr.f32.gmra.mxu0 %v1412
    %v1485 = vpop.f32.mrf.mxu0
    %v1486 = vadd.f32 0.0, %v1485
    %v1487 = vpop.f32.mrf.mxu0
    %v1488 = vadd.f32 0.0, %v1487
    %1489 = vdwg.mxu0
    %1490 = vmatprep.subr.mxu0 0.0
    %1491 = vmatpush1.msra.mxu0 %v428
    %1492 = vmatprep.subr.mxu0 0.0
    %1493 = vmatpush1.msra.mxu0 %v425
    %1494 = vmatprep.subr.mxu0 0.0
    %1495 = vmatpush1.msra.mxu0 %v422
    %1496 = vmatprep.subr.mxu0 0.0
    %1497 = vmatpush1.msra.mxu0 %v419
    %1498 = vmatprep.subr.mxu0 0.0
    %1499 = vmatpush1.msra.mxu0 %v416
    %1500 = vmatprep.subr.mxu0 0.0
    %1501 = vmatpush1.msra.mxu0 %v413
    %1502 = vmatprep.subr.mxu0 0.0
    %1503 = vmatpush1.msra.mxu0 %v410
    %1504 = vmatprep.subr.mxu0 0.0
    %1505 = vmatpush1.msra.mxu0 %v407
    %1506 = vmatprep.subr.mxu0 0.0
    %1507 = vmatpush1.msra.mxu0 %v404
    %1508 = vmatprep.subr.mxu0 0.0
    %1509 = vmatpush1.msra.mxu0 %v401
    %1510 = vmatprep.subr.mxu0 0.0
    %1511 = vmatpush1.msra.mxu0 %v398
    %1512 = vmatprep.subr.mxu0 0.0
    %1513 = vmatpush1.msra.mxu0 %v395
    %1514 = vmatprep.subr.mxu0 0.0
    %1515 = vmatpush1.msra.mxu0 %v392
    %1516 = vmatprep.subr.mxu0 0.0
    %1517 = vmatpush1.msra.mxu0 %v389
    %1518 = vmatprep.subr.mxu0 0.0
    %1519 = vmatpush1.msra.mxu0 %v386
    %1520 = vmatprep.subr.mxu0 0.0
    %1521 = vmatpush1.msra.mxu0 %v383
    %1522 = vmatprep.subr.mxu0 0.0
    %1523 = vmatpush2.msra.mxu0 0.0
    %1524 = vmatprep.subr.mxu0 0.0
    %1525 = vmatpush2.msra.mxu0 0.0
    %1526 = vmatprep.subr.mxu0 0.0
    %1527 = vmatpush2.msra.mxu0 0.0
    %1528 = vmatprep.subr.mxu0 0.0
    %1529 = vmatpush2.msra.mxu0 0.0
    %1530 = vmatprep.subr.mxu0 0.0
    %1531 = vmatpush2.msra.mxu0 0.0
    %1532 = vmatprep.subr.mxu0 0.0
    %1533 = vmatpush2.msra.mxu0 0.0
    %1534 = vmatprep.subr.mxu0 0.0
    %1535 = vmatpush2.msra.mxu0 0.0
    %1536 = vmatprep.subr.mxu0 0.0
    %1537 = vmatpush2.msra.mxu0 0.0
    %1538 = vmatprep.subr.mxu0 0.0
    %1539 = vmatpush2.msra.mxu0 0.0
    %1540 = vmatprep.subr.mxu0 0.0
    %1541 = vmatpush2.msra.mxu0 0.0
    %1542 = vmatprep.subr.mxu0 0.0
    %1543 = vmatpush2.msra.mxu0 0.0
    %1544 = vmatprep.subr.mxu0 0.0
    %1545 = vmatpush2.msra.mxu0 0.0
    %1546 = vmatprep.subr.mxu0 0.0
    %1547 = vmatpush2.msra.mxu0 0.0
    %1548 = vmatprep.subr.mxu0 0.0
    %1549 = vmatpush2.msra.mxu0 0.0
    %1550 = vmatprep.subr.mxu0 0.0
    %1551 = vmatpush2.msra.mxu0 0.0
    %1552 = vmatprep.subr.mxu0 0.0
    %1553 = vmatpush2.msra.mxu0 0.0
    %1554 = vmatprep.mubr.f32.mxu0 0.0
    %1555 = vmatmul.mubr.f32.gmra.mxu0 %v1412
    %v1556 = vpop.f32.mrf.mxu0
    %v1557 = vadd.f32 0.0, %v1556
    %v1558 = vpop.f32.mrf.mxu0
    %1559 = vdwg.mxu0
    %v1560 = vadd.f32 %v1416, %v1486
    %v1561 = vadd.f32 %v1417, %v1488
    %v1562 = vmul.f32 %v1560, 0.5
    %v1563 = vmul.f32 %v1561, 0.5
    %v1564 = vtanh.pop %v1562
    %v1565 = vtanh.pop %v1563
    %v1566 = vadd.f32 %v1564, 1.0
    %v1567 = vadd.f32 %v1565, 1.0
    %v1568 = vmul.f32 %v1566, 0.5
    %v1569 = vmul.f32 %v1567, 0.5
    %v1570 = vadd.f32 %v1557, %v373
    %v1571 = vmul.f32 %v1568, %v1570
    %v1572 = vadd.f32 %v1418, %v1571
    %v1573 = vtanh.pop %v1572
    %v1574 = vsub.f32 1.0, %v1569
    %v1575 = vmul.f32 %v1574, %v1573
    %v1576 = vmul.f32 %v1569, %v1412
    %v1577 = vadd.f32 %v1575, %v1576
    %s1578 = smul.u32 7, 3
    %s1579 = smul.addr %s1578, 8
    %s1580 = scalar_lea.vmem [#allocation2], %s1579
    %v1581 = vld [vmem:[%s1580] sm:$0xff]
    %v1582 = vld [vmem:[%s1580 + $0x8] sm:$0xff]
    %v1583 = vld [vmem:[%s1580 + $0x10] sm:$0xff]
    %1584 = vmatprep.subr.mxu0 %v427
    %1585 = vmatpush1.msra.mxu0 %v426
    %1586 = vmatprep.subr.mxu0 %v424
    %1587 = vmatpush1.msra.mxu0 %v423
    %1588 = vmatprep.subr.mxu0 %v421
    %1589 = vmatpush1.msra.mxu0 %v420
    %1590 = vmatprep.subr.mxu0 %v418
    %1591 = vmatpush1.msra.mxu0 %v417
    %1592 = vmatprep.subr.mxu0 %v415
    %1593 = vmatpush1.msra.mxu0 %v414
    %1594 = vmatprep.subr.mxu0 %v412
    %1595 = vmatpush1.msra.mxu0 %v411
    %1596 = vmatprep.subr.mxu0 %v409
    %1597 = vmatpush1.msra.mxu0 %v408
    %1598 = vmatprep.subr.mxu0 %v406
    %1599 = vmatpush1.msra.mxu0 %v405
    %1600 = vmatprep.subr.mxu0 %v403
    %1601 = vmatpush1.msra.mxu0 %v402
    %1602 = vmatprep.subr.mxu0 %v400
    %1603 = vmatpush1.msra.mxu0 %v399
    %1604 = vmatprep.subr.mxu0 %v397
    %1605 = vmatpush1.msra.mxu0 %v396
    %1606 = vmatprep.subr.mxu0 %v394
    %1607 = vmatpush1.msra.mxu0 %v393
    %1608 = vmatprep.subr.mxu0 %v391
    %1609 = vmatpush1.msra.mxu0 %v390
    %1610 = vmatprep.subr.mxu0 %v388
    %1611 = vmatpush1.msra.mxu0 %v387
    %1612 = vmatprep.subr.mxu0 %v385
    %1613 = vmatpush1.msra.mxu0 %v384
    %1614 = vmatprep.subr.mxu0 %v382
    %1615 = vmatpush1.msra.mxu0 %v381
    %1616 = vmatprep.subr.mxu0 0.0
    %1617 = vmatpush2.msra.mxu0 0.0
    %1618 = vmatprep.subr.mxu0 0.0
    %1619 = vmatpush2.msra.mxu0 0.0
    %1620 = vmatprep.subr.mxu0 0.0
    %1621 = vmatpush2.msra.mxu0 0.0
    %1622 = vmatprep.subr.mxu0 0.0
    %1623 = vmatpush2.msra.mxu0 0.0
    %1624 = vmatprep.subr.mxu0 0.0
    %1625 = vmatpush2.msra.mxu0 0.0
    %1626 = vmatprep.subr.mxu0 0.0
    %1627 = vmatpush2.msra.mxu0 0.0
    %1628 = vmatprep.subr.mxu0 0.0
    %1629 = vmatpush2.msra.mxu0 0.0
    %1630 = vmatprep.subr.mxu0 0.0
    %1631 = vmatpush2.msra.mxu0 0.0
    %1632 = vmatprep.subr.mxu0 0.0
    %1633 = vmatpush2.msra.mxu0 0.0
    %1634 = vmatprep.subr.mxu0 0.0
    %1635 = vmatpush2.msra.mxu0 0.0
    %1636 = vmatprep.subr.mxu0 0.0
    %1637 = vmatpush2.msra.mxu0 0.0
    %1638 = vmatprep.subr.mxu0 0.0
    %1639 = vmatpush2.msra.mxu0 0.0
    %1640 = vmatprep.subr.mxu0 0.0
    %1641 = vmatpush2.msra.mxu0 0.0
    %1642 = vmatprep.subr.mxu0 0.0
    %1643 = vmatpush2.msra.mxu0 0.0
    %1644 = vmatprep.subr.mxu0 0.0
    %1645 = vmatpush2.msra.mxu0 0.0
    %1646 = vmatprep.subr.mxu0 0.0
    %1647 = vmatpush2.msra.mxu0 0.0
    %1648 = vmatprep.mubr.f32.mxu0 0.0
    %1649 = vmatmul.mubr.f32.gmra.mxu0 %v1577
    %v1650 = vpop.f32.mrf.mxu0
    %v1651 = vadd.f32 0.0, %v1650
    %v1652 = vpop.f32.mrf.mxu0
    %v1653 = vadd.f32 0.0, %v1652
    %1654 = vdwg.mxu0
    %1655 = vmatprep.subr.mxu0 0.0
    %1656 = vmatpush1.msra.mxu0 %v428
    %1657 = vmatprep.subr.mxu0 0.0
    %1658 = vmatpush1.msra.mxu0 %v425
    %1659 = vmatprep.subr.mxu0 0.0
    %1660 = vmatpush1.msra.mxu0 %v422
    %1661 = vmatprep.subr.mxu0 0.0
    %1662 = vmatpush1.msra.mxu0 %v419
    %1663 = vmatprep.subr.mxu0 0.0
    %1664 = vmatpush1.msra.mxu0 %v416
    %1665 = vmatprep.subr.mxu0 0.0
    %1666 = vmatpush1.msra.mxu0 %v413
    %1667 = vmatprep.subr.mxu0 0.0
    %1668 = vmatpush1.msra.mxu0 %v410
    %1669 = vmatprep.subr.mxu0 0.0
    %1670 = vmatpush1.msra.mxu0 %v407
    %1671 = vmatprep.subr.mxu0 0.0
    %1672 = vmatpush1.msra.mxu0 %v404
    %1673 = vmatprep.subr.mxu0 0.0
    %1674 = vmatpush1.msra.mxu0 %v401
    %1675 = vmatprep.subr.mxu0 0.0
    %1676 = vmatpush1.msra.mxu0 %v398
    %1677 = vmatprep.subr.mxu0 0.0
    %1678 = vmatpush1.msra.mxu0 %v395
    %1679 = vmatprep.subr.mxu0 0.0
    %1680 = vmatpush1.msra.mxu0 %v392
    %1681 = vmatprep.subr.mxu0 0.0
    %1682 = vmatpush1.msra.mxu0 %v389
    %1683 = vmatprep.subr.mxu0 0.0
    %1684 = vmatpush1.msra.mxu0 %v386
    %1685 = vmatprep.subr.mxu0 0.0
    %1686 = vmatpush1.msra.mxu0 %v383
    %1687 = vmatprep.subr.mxu0 0.0
    %1688 = vmatpush2.msra.mxu0 0.0
    %1689 = vmatprep.subr.mxu0 0.0
    %1690 = vmatpush2.msra.mxu0 0.0
    %1691 = vmatprep.subr.mxu0 0.0
    %1692 = vmatpush2.msra.mxu0 0.0
    %1693 = vmatprep.subr.mxu0 0.0
    %1694 = vmatpush2.msra.mxu0 0.0
    %1695 = vmatprep.subr.mxu0 0.0
    %1696 = vmatpush2.msra.mxu0 0.0
    %1697 = vmatprep.subr.mxu0 0.0
    %1698 = vmatpush2.msra.mxu0 0.0
    %1699 = vmatprep.subr.mxu0 0.0
    %1700 = vmatpush2.msra.mxu0 0.0
    %1701 = vmatprep.subr.mxu0 0.0
    %1702 = vmatpush2.msra.mxu0 0.0
    %1703 = vmatprep.subr.mxu0 0.0
    %1704 = vmatpush2.msra.mxu0 0.0
    %1705 = vmatprep.subr.mxu0 0.0
    %1706 = vmatpush2.msra.mxu0 0.0
    %1707 = vmatprep.subr.mxu0 0.0
    %1708 = vmatpush2.msra.mxu0 0.0
    %1709 = vmatprep.subr.mxu0 0.0
    %1710 = vmatpush2.msra.mxu0 0.0
    %1711 = vmatprep.subr.mxu0 0.0
    %1712 = vmatpush2.msra.mxu0 0.0
    %1713 = vmatprep.subr.mxu0 0.0
    %1714 = vmatpush2.msra.mxu0 0.0
    %1715 = vmatprep.subr.mxu0 0.0
    %1716 = vmatpush2.msra.mxu0 0.0
    %1717 = vmatprep.subr.mxu0 0.0
    %1718 = vmatpush2.msra.mxu0 0.0
    %1719 = vmatprep.mubr.f32.mxu0 0.0
    %1720 = vmatmul.mubr.f32.gmra.mxu0 %v1577
    %v1721 = vpop.f32.mrf.mxu0
    %v1722 = vadd.f32 0.0, %v1721
    %v1723 = vpop.f32.mrf.mxu0
    %1724 = vdwg.mxu0
    %v1725 = vadd.f32 %v1581, %v1651
    %v1726 = vadd.f32 %v1582, %v1653
    %v1727 = vmul.f32 %v1725, 0.5
    %v1728 = vmul.f32 %v1726, 0.5
    %v1729 = vtanh.pop %v1727
    %v1730 = vtanh.pop %v1728
    %v1731 = vadd.f32 %v1729, 1.0
    %v1732 = vadd.f32 %v1730, 1.0
    %v1733 = vmul.f32 %v1731, 0.5
    %v1734 = vmul.f32 %v1732, 0.5
    %v1735 = vadd.f32 %v1722, %v373
    %v1736 = vmul.f32 %v1733, %v1735
    %v1737 = vadd.f32 %v1583, %v1736
    %v1738 = vtanh.pop %v1737
    %v1739 = vsub.f32 1.0, %v1734
    %v1740 = vmul.f32 %v1739, %v1738
    %v1741 = vmul.f32 %v1734, %v1577
    %v1742 = vadd.f32 %v1740, %v1741
    %v1743 = vld [vmem:[#allocation6] sm:$0xff]
    %v1744 = vld [vmem:[#allocation6 + $0x8] sm:$0xff]
    %v1745 = vld [vmem:[#allocation6 + $0x10] sm:$0xff]
    %v1746 = vld [vmem:[#allocation6 + $0x18] sm:$0xff]
    %v1747 = vld [vmem:[#allocation6 + $0x20] sm:$0xff]
    %v1748 = vld [vmem:[#allocation6 + $0x28] sm:$0xff]
    %v1749 = vld [vmem:[#allocation6 + $0x30] sm:$0xff]
    %v1750 = vld [vmem:[#allocation6 + $0x38] sm:$0xff]
    %v1751 = vld [vmem:[#allocation6 + $0x40] sm:$0xff]
    %v1752 = vld [vmem:[#allocation6 + $0x48] sm:$0xff]
    %v1753 = vld [vmem:[#allocation6 + $0x50] sm:$0xff]
    %v1754 = vld [vmem:[#allocation6 + $0x58] sm:$0xff]
    %v1755 = vld [vmem:[#allocation6 + $0x60] sm:$0xff]
    %v1756 = vld [vmem:[#allocation6 + $0x68] sm:$0xff]
    %v1757 = vld [vmem:[#allocation6 + $0x70] sm:$0xff]
    %v1758 = vld [vmem:[#allocation6 + $0x78] sm:$0xff]
    %v1759 = vld [vmem:[%s6] sm:$0x1]
    %v1761 = vlaneseq
    %v1762 = vshrl.u32 %v1761, 7
    %v1763 = vsub.s32 0, %v1762
    %v1764 = vrot.slane %v1759, %v1763
    %1766 = vmatprep.subr.mxu0 0.0
    %1767 = vmatpush1.msra.mxu0 %v1758
    %1768 = vmatprep.subr.mxu0 0.0
    %1769 = vmatpush1.msra.mxu0 %v1757
    %1770 = vmatprep.subr.mxu0 0.0
    %1771 = vmatpush1.msra.mxu0 %v1756
    %1772 = vmatprep.subr.mxu0 0.0
    %1773 = vmatpush1.msra.mxu0 %v1755
    %1774 = vmatprep.subr.mxu0 0.0
    %1775 = vmatpush1.msra.mxu0 %v1754
    %1776 = vmatprep.subr.mxu0 0.0
    %1777 = vmatpush1.msra.mxu0 %v1753
    %1778 = vmatprep.subr.mxu0 0.0
    %1779 = vmatpush1.msra.mxu0 %v1752
    %1780 = vmatprep.subr.mxu0 0.0
    %1781 = vmatpush1.msra.mxu0 %v1751
    %1782 = vmatprep.subr.mxu0 0.0
    %1783 = vmatpush1.msra.mxu0 %v1750
    %1784 = vmatprep.subr.mxu0 0.0
    %1785 = vmatpush1.msra.mxu0 %v1749
    %1786 = vmatprep.subr.mxu0 0.0
    %1787 = vmatpush1.msra.mxu0 %v1748
    %1788 = vmatprep.subr.mxu0 0.0
    %1789 = vmatpush1.msra.mxu0 %v1747
    %1790 = vmatprep.subr.mxu0 0.0
    %1791 = vmatpush1.msra.mxu0 %v1746
    %1792 = vmatprep.subr.mxu0 0.0
    %1793 = vmatpush1.msra.mxu0 %v1745
    %1794 = vmatprep.subr.mxu0 0.0
    %1795 = vmatpush1.msra.mxu0 %v1744
    %1796 = vmatprep.subr.mxu0 0.0
    %1797 = vmatpush1.msra.mxu0 %v1743
    %1798 = vmatprep.subr.mxu0 0.0
    %1799 = vmatpush2.msra.mxu0 0.0
    %1800 = vmatprep.subr.mxu0 0.0
    %1801 = vmatpush2.msra.mxu0 0.0
    %1802 = vmatprep.subr.mxu0 0.0
    %1803 = vmatpush2.msra.mxu0 0.0
    %1804 = vmatprep.subr.mxu0 0.0
    %1805 = vmatpush2.msra.mxu0 0.0
    %1806 = vmatprep.subr.mxu0 0.0
    %1807 = vmatpush2.msra.mxu0 0.0
    %1808 = vmatprep.subr.mxu0 0.0
    %1809 = vmatpush2.msra.mxu0 0.0
    %1810 = vmatprep.subr.mxu0 0.0
    %1811 = vmatpush2.msra.mxu0 0.0
    %1812 = vmatprep.subr.mxu0 0.0
    %1813 = vmatpush2.msra.mxu0 0.0
    %1814 = vmatprep.subr.mxu0 0.0
    %1815 = vmatpush2.msra.mxu0 0.0
    %1816 = vmatprep.subr.mxu0 0.0
    %1817 = vmatpush2.msra.mxu0 0.0
    %1818 = vmatprep.subr.mxu0 0.0
    %1819 = vmatpush2.msra.mxu0 0.0
    %1820 = vmatprep.subr.mxu0 0.0
    %1821 = vmatpush2.msra.mxu0 0.0
    %1822 = vmatprep.subr.mxu0 0.0
    %1823 = vmatpush2.msra.mxu0 0.0
    %1824 = vmatprep.subr.mxu0 0.0
    %1825 = vmatpush2.msra.mxu0 0.0
    %1826 = vmatprep.subr.mxu0 0.0
    %1827 = vmatpush2.msra.mxu0 0.0
    %1828 = vmatprep.subr.mxu0 0.0
    %1829 = vmatpush2.msra.mxu0 0.0
    %1830 = vmatprep.mubr.f32.mxu0 0.0
    %1831 = vmatmul.mubr.f32.gmra.mxu0 %v1742
    %v1832 = vpop.f32.mrf.mxu0
    %v1833 = vadd.f32 %v1764, %v1832
    %v1834 = vpop.f32.mrf.mxu0
    %1835 = vdwg.mxu0
    %v1836 = vmul.f32 %v1833, 0.5
    %v1837 = vtanh.pop %v1836
    %v1838 = vadd.f32 %v1837, 1.0
    %v1839 = vmul.f32 %v1838, 0.5
    %1840 = vst [vmem:[#allocation8] sm:$0xff] %v1839
    // Predicated region
    $region38: #{tpu_custom_call.1} parent=1 // pred_check
      _
    $region39: #{tpu_custom_call.1} parent=1 // pred_check_branch
      %1842 = sbr.rel (0) target = $region41
    $region40: #{tpu_custom_call.1} parent=1 // pred_region
      %s1844 = ssub.s32 128, 128
      %1845 = vsyncadd [#allocation5], %s1844
      %s1847 = sshll.u32 [#allocation8], 4
      %s1848 = int_to_ptr.vmem [resolvable:$true] %s1847
      %1850 = dma.vmem_to_hbm [thread:$0]  %s1848, 128, %s7, [#allocation5]
    $region41: #{tpu_custom_call.1} parent=1 // pred_fallthru
      _
    // Predicated region
    $region42: #{tpu_custom_call.1} parent=1 // pred_check
      _
    $region43: #{tpu_custom_call.1} parent=1 // pred_check_branch
      %1852 = sbr.rel (0) target = $region45
    $region44: #{tpu_custom_call.1} parent=1 // pred_region
      %1853 = dma.done [#allocation5], 128
    $region45: #{tpu_custom_call.1} parent=1 // pred_fallthru
      _
    %1854 = vsyncpa [#allocation4], 1
    %1855 = vsyncpa [#allocation7], 1
    %1856 = vsyncpa [#allocation5], 1

</llo_original>
